<compile_context>
chip_gen: v7x
topology: tpu7x:2x2x1
jax: 0.10.0
libtpu: 0.0.40
codegen_flags: <defaults>
</compile_context>

<pallas_src>
import jax
import jax.numpy as jnp
from jax import lax
from jax.experimental import pallas as pl
from jax.experimental.pallas import tpu as pltpu


def _make_kernel(B_blk, T, V, H, E):
    def kernel(texts_ref, table_ref, heads_t_ref, w_ref, bias_ref, pred_ref, attn_ref):
        # ---- fused word2vec lookup: one-hot gather on the MXU -------------------
        ids = texts_ref[...]                                           # (B_blk, T) int32
        onehot = (ids[..., None] ==
                  lax.broadcasted_iota(jnp.int32, (B_blk, T, V), 2)
                  ).astype(jnp.float32)                                # (B_blk, T, V)
        emb_flat = jnp.dot(onehot.reshape(B_blk * T, V), table_ref[...],
                           preferred_element_type=jnp.float32)         # (B_blk*T, E)

        # ---- attention scores: emb @ heads^T (MXU-natural, no relayout of emb) --
        scores = jnp.dot(emb_flat, heads_t_ref[...],
                         preferred_element_type=jnp.float32)           # (B_blk*T, H)
        scores = jnp.transpose(scores.reshape(B_blk, T, H), (0, 2, 1))  # (B_blk, H, T)

        # ---- softmax over the sequence (lane) axis, exact divide -----------------
        m = jnp.max(scores, axis=-1, keepdims=True)
        p = jnp.exp(scores - m)
        attn = p / jnp.sum(p, axis=-1, keepdims=True)                  # (B_blk, H, T)

        # ---- weighted embeddings: per-text attn @ emb (batched MXU) --------------
        emb = emb_flat.reshape(B_blk, T, E)                            # (B_blk, T, E)
        weighted = jnp.einsum('bht,bte->bhe', attn, emb,
                              preferred_element_type=jnp.float32)      # (B_blk, H, E)

        # ---- output layer: one matvec for the whole block + sigmoid --------------
        logits = jnp.dot(weighted.reshape(B_blk, H * E), w_ref[...],
                         preferred_element_type=jnp.float32) + bias_ref[0]   # (B_blk, 1)
        pred_ref[...] = 1.0 / (1.0 + jnp.exp(-logits))

        # lane-dense attention store: (B_blk, H*T) — wrapper reshapes to (B, H, T).
        attn_ref[...] = attn.reshape(B_blk, H * T)

    return kernel


def attention_nn_classifier_forward(texts, embedding_table, attention_heads,
                                    out_weight, out_bias):
    """texts: (B, T) int32 word ids.

    Returns (predictions (B,), a_vectors (B, H, T)).  For B == 1 this matches the
    PyTorch module exactly; for B > 1 each text gets its own Linear+sigmoid output
    (the module's reshape(-1) only supports one text per call, so this is the
    natural per-text generalization).
    """
    B, T = texts.shape
    H, E = attention_heads.shape
    V = embedding_table.shape[0]

    # Block the batch axis: 8 texts per grid step keeps the (8,128) sublane rule
    # satisfied and leaves >= 2 grid steps for B >= 16 (v7x megacore).
    B_blk = 8 if (B % 8 == 0) else B
    n_blocks = B // B_blk

    texts = texts.astype(jnp.int32)
    table = embedding_table.astype(jnp.float32)              # (V, E), VMEM-resident
    heads_t = attention_heads.astype(jnp.float32).T          # (E, H), MXU-natural RHS
    w_r = out_weight.reshape(H * E, 1).astype(jnp.float32)   # head-major == reshape(-1)
    b_r = out_bias.reshape(1).astype(jnp.float32)

    kernel = _make_kernel(B_blk, T, V, H, E)

    pred, attn_flat = pl.pallas_call(
        kernel,
        out_shape=(
            jax.ShapeDtypeStruct((B, 1), jnp.float32),
            jax.ShapeDtypeStruct((B, H * T), jnp.float32),
        ),
        grid=(n_blocks,),
        in_specs=[
            pl.BlockSpec((B_blk, T), lambda i: (i, 0)),               # text ids
            pl.BlockSpec((V, E), lambda i: (0, 0)),                   # word2vec table
            pl.BlockSpec((E, H), lambda i: (0, 0)),                   # heads^T
            pl.BlockSpec((H * E, 1), lambda i: (0, 0)),               # Linear weight
            pl.BlockSpec(memory_space=pltpu.MemorySpace.SMEM),        # Linear bias
        ],
        out_specs=(
            pl.BlockSpec((B_blk, 1), lambda i: (i, 0)),               # predictions
            pl.BlockSpec((B_blk, H * T), lambda i: (i, 0)),           # attention (lane-dense)
        ),
        compiler_params=pltpu.CompilerParams(
            dimension_semantics=("parallel",),    # batch blocks: megacore-parallel on v7x
        ),
    )(texts, table, heads_t, w_r, b_r)

    predictions = pred.reshape(B)
    a_vectors = attn_flat.reshape(B, H, T)
    return predictions, a_vectors


def _reference_forward(texts, embedding_table, attention_heads, out_weight, out_bias):
    """Pure-JAX f32 reference mirroring the PyTorch code (per-text Linear for B > 1)."""
    emb = jnp.take(embedding_table, texts, axis=0)                   # (B, T, E)
    r = jnp.einsum('he,bte->bht', attention_heads, emb)              # (B, H, T)
    a = jax.nn.softmax(r, axis=2)
    w_emb = jnp.einsum('bht,bte->bhe', a, emb)                       # (B, H, E)
    B = texts.shape[0]
    logits = w_emb.reshape(B, -1) @ out_weight.reshape(-1) + out_bias[0]
    return jax.nn.sigmoid(logits), a


if __name__ == "__main__":
    # small shapes consistent with the module (embedding_size, num_heads are parameters)
    VOCAB, B, T, E, H = 64, 16, 16, 128, 8

    key = jax.random.PRNGKey(0)
    k_emb, k_heads, k_w, k_b, k_txt = jax.random.split(key, 5)

    # deterministic "word2vec" table (realistic O(0.1) magnitudes) and parameters
    embedding_table = 0.1 * jax.random.normal(k_emb, (VOCAB, E), dtype=jnp.float32)
    attention_heads = jax.random.normal(k_heads, (H, E), dtype=jnp.float32)   # torch.randn
    bound = 1.0 / float(H * E) ** 0.5                                          # nn.Linear init
    out_weight = jax.random.uniform(k_w, (1, H * E), jnp.float32, -bound, bound)
    out_bias = jax.random.uniform(k_b, (1,), jnp.float32, -bound, bound)

    # a batch of texts of word ids
    texts = jax.random.randint(k_txt, (B, T), 0, VOCAB, dtype=jnp.int32)

    predictions, a_vectors = attention_nn_classifier_forward(
        texts, embedding_table, attention_heads, out_weight, out_bias)
    jax.block_until_ready((predictions, a_vectors))

    ref_pred, ref_a = _reference_forward(
        texts, embedding_table, attention_heads, out_weight, out_bias)

    assert predictions.shape == (B,) and a_vectors.shape == (B, H, T)
    assert jnp.allclose(predictions, ref_pred, atol=1e-4), (predictions, ref_pred)
    assert jnp.allclose(a_vectors, ref_a, atol=1e-4), float(
        jnp.max(jnp.abs(a_vectors - ref_a)))

    print("KERNEL_OK")
</pallas_src>

<mosaic_0001>
module attributes {stable_mosaic.version = 11 : i64} {
  func.func @kernel(%arg0: i32, %arg1: memref<8x16xi32, #tpu.memory_space<vmem>>, %arg2: memref<64x128xf32, #tpu.memory_space<vmem>>, %arg3: memref<128x8xf32, #tpu.memory_space<vmem>>, %arg4: memref<1024x1xf32, #tpu.memory_space<vmem>>, %arg5: memref<1xf32, #tpu.memory_space<smem>>, %arg6: memref<8x1xf32, #tpu.memory_space<vmem>>, %arg7: memref<8x128xf32, #tpu.memory_space<vmem>>) attributes {dimension_semantics = [#tpu.dimension_semantics<parallel>], iteration_bounds = array<i64: 2>, scalar_prefetch = 0 : i64, scratch_operands = 0 : i64, tpu.core_type = #tpu.core_type<tc>, window_params = [{transform_indices = @transform_0, window_bounds = array<i64: 8, 16>}, {pipeline_mode = #tpu.pipeline_mode<synchronous>, transform_indices = @transform_1, window_bounds = array<i64: 64, 128>}, {pipeline_mode = #tpu.pipeline_mode<synchronous>, transform_indices = @transform_2, window_bounds = array<i64: 128, 8>}, {pipeline_mode = #tpu.pipeline_mode<synchronous>, transform_indices = @transform_3, window_bounds = array<i64: 1024, 1>}, {transform_indices = @transform_4, window_bounds = array<i64: 1>}, {transform_indices = @transform_5, window_bounds = array<i64: 8, 1>}, {transform_indices = @transform_6, window_bounds = array<i64: 8, 128>}]} {
    %c0 = arith.constant 0 : index
    %c0_0 = arith.constant 0 : index
    %0 = vector.load %arg1[%c0, %c0_0] : memref<8x16xi32, #tpu.memory_space<vmem>>, vector<8x16xi32>
    %1 = vector.shape_cast %0 : vector<8x16xi32> to vector<8x16x1xi32>
    %2 = tpu.iota {dimensions = array<i32: 2>} : vector<8x16x64xi32>
    %3 = vector.broadcast %1 : vector<8x16x1xi32> to vector<8x16x64xi32>
    %4 = arith.cmpi eq, %3, %2 : vector<8x16x64xi32>
    %5 = arith.extui %4 : vector<8x16x64xi1> to vector<8x16x64xi32>
    %6 = arith.sitofp %5 : vector<8x16x64xi32> to vector<8x16x64xf32>
    %7 = vector.shape_cast %6 : vector<8x16x64xf32> to vector<128x64xf32>
    %c0_1 = arith.constant 0 : index
    %c0_2 = arith.constant 0 : index
    %8 = vector.load %arg2[%c0_1, %c0_2] : memref<64x128xf32, #tpu.memory_space<vmem>>, vector<64x128xf32>
    %cst = arith.constant dense<0.000000e+00> : vector<128x128xf32>
    %9 = tpu.matmul %7, %8, %cst {dimension_numbers = #tpu.dot_dimension_numbers<[1], [0], [0], [1], [0, 0, 1, 1], [], []>} : vector<128x64xf32>, vector<64x128xf32>, vector<128x128xf32> -> vector<128x128xf32>
    %c0_3 = arith.constant 0 : index
    %c0_4 = arith.constant 0 : index
    %10 = vector.load %arg3[%c0_3, %c0_4] : memref<128x8xf32, #tpu.memory_space<vmem>>, vector<128x8xf32>
    %cst_5 = arith.constant dense<0.000000e+00> : vector<128x8xf32>
    %11 = tpu.matmul %9, %10, %cst_5 {dimension_numbers = #tpu.dot_dimension_numbers<[1], [0], [0], [1], [0, 0, 1, 1], [], []>} : vector<128x128xf32>, vector<128x8xf32>, vector<128x8xf32> -> vector<128x8xf32>
    %12 = vector.shape_cast %11 : vector<128x8xf32> to vector<8x16x8xf32>
    %13 = tpu.transpose %12, [0, 2, 1] : vector<8x16x8xf32> -> vector<8x8x16xf32>
    %cst_6 = arith.constant dense<0xFF800000> : vector<8x8xf32>
    %14 = vector.multi_reduction <maximumf>, %13, %cst_6 [2] : vector<8x8x16xf32> to vector<8x8xf32>
    %15 = vector.shape_cast %14 : vector<8x8xf32> to vector<8x8x1xf32>
    %16 = vector.broadcast %15 : vector<8x8x1xf32> to vector<8x8x16xf32>
    %17 = arith.subf %13, %16 : vector<8x8x16xf32>
    %18 = math.exp %17 : vector<8x8x16xf32>
    %cst_7 = arith.constant dense<0.000000e+00> : vector<8x8xf32>
    %19 = vector.multi_reduction <add>, %18, %cst_7 [2] : vector<8x8x16xf32> to vector<8x8xf32>
    %20 = vector.shape_cast %19 : vector<8x8xf32> to vector<8x8x1xf32>
    %21 = vector.broadcast %20 : vector<8x8x1xf32> to vector<8x8x16xf32>
    %22 = arith.divf %18, %21 : vector<8x8x16xf32>
    %23 = vector.shape_cast %9 : vector<128x128xf32> to vector<8x16x128xf32>
    "tpu.trace_start"() <{level = 10 : i32, message = "bht,bte->bhe"}> : () -> ()
    %cst_8 = arith.constant dense<0.000000e+00> : vector<8x8x128xf32>
    %24 = tpu.matmul %22, %23, %cst_8 {dimension_numbers = #tpu.dot_dimension_numbers<[2], [1], [1], [2], [0, 0, 0, 1, 1, 2], [0], [0]>} : vector<8x8x16xf32>, vector<8x16x128xf32>, vector<8x8x128xf32> -> vector<8x8x128xf32>
    "tpu.trace_stop"() : () -> ()
    %25 = vector.shape_cast %24 : vector<8x8x128xf32> to vector<8x1024xf32>
    %c0_9 = arith.constant 0 : index
    %c0_10 = arith.constant 0 : index
    %26 = vector.load %arg4[%c0_9, %c0_10] : memref<1024x1xf32, #tpu.memory_space<vmem>>, vector<1024x1xf32>
    %cst_11 = arith.constant dense<0.000000e+00> : vector<8x1xf32>
    %27 = tpu.matmul %25, %26, %cst_11 {dimension_numbers = #tpu.dot_dimension_numbers<[1], [0], [0], [1], [0, 0, 1, 1], [], []>} : vector<8x1024xf32>, vector<1024x1xf32>, vector<8x1xf32> -> vector<8x1xf32>
    %c0_12 = arith.constant 0 : index
    %28 = memref.load %arg5[%c0_12] : memref<1xf32, #tpu.memory_space<smem>>
    %29 = vector.broadcast %28 : f32 to vector<8x1xf32>
    %30 = arith.addf %27, %29 : vector<8x1xf32>
    %cst_13 = arith.constant 0.000000e+00 : f32
    %31 = vector.broadcast %cst_13 : f32 to vector<8x1xf32>
    %32 = arith.subf %31, %30 : vector<8x1xf32>
    %33 = math.exp %32 : vector<8x1xf32>
    %cst_14 = arith.constant 1.000000e+00 : f32
    %34 = vector.broadcast %cst_14 : f32 to vector<8x1xf32>
    %35 = arith.addf %34, %33 : vector<8x1xf32>
    %cst_15 = arith.constant 1.000000e+00 : f32
    %36 = vector.broadcast %cst_15 : f32 to vector<8x1xf32>
    %37 = arith.divf %36, %35 : vector<8x1xf32>
    %c0_16 = arith.constant 0 : index
    %c0_17 = arith.constant 0 : index
    %38 = vector.load %arg6[%c0_16, %c0_17] : memref<8x1xf32, #tpu.memory_space<vmem>>, vector<8x1xf32>
    tpu.vector_store %arg6[%c0_16, %c0_17], %37 {strides = array<i32>} : memref<8x1xf32, #tpu.memory_space<vmem>>, vector<8x1xf32>,
    %39 = vector.shape_cast %22 : vector<8x8x16xf32> to vector<8x128xf32>
    %c0_18 = arith.constant 0 : index
    %c0_19 = arith.constant 0 : index
    %40 = vector.load %arg7[%c0_18, %c0_19] : memref<8x128xf32, #tpu.memory_space<vmem>>, vector<8x128xf32>
    tpu.vector_store %arg7[%c0_18, %c0_19], %39 {strides = array<i32>} : memref<8x128xf32, #tpu.memory_space<vmem>>, vector<8x128xf32>,
    return
  }
  func.func @transform_0(%arg0: i32) -> (i32, i32) {
    %c0_i32 = arith.constant 0 : i32
    %c0_i32_0 = arith.constant 0 : i32
    return %arg0, %c0_i32 : i32, i32
  }
  func.func @transform_1(%arg0: i32) -> (i32, i32) {
    %c0_i32 = arith.constant 0 : i32
    %c0_i32_0 = arith.constant 0 : i32
    %c0_i32_1 = arith.constant 0 : i32
    return %c0_i32, %c0_i32_0 : i32, i32
  }
  func.func @transform_2(%arg0: i32) -> (i32, i32) {
    %c0_i32 = arith.constant 0 : i32
    %c0_i32_0 = arith.constant 0 : i32
    %c0_i32_1 = arith.constant 0 : i32
    return %c0_i32, %c0_i32_0 : i32, i32
  }
  func.func @transform_3(%arg0: i32) -> (i32, i32) {
    %c0_i32 = arith.constant 0 : i32
    %c0_i32_0 = arith.constant 0 : i32
    %c0_i32_1 = arith.constant 0 : i32
    return %c0_i32, %c0_i32_0 : i32, i32
  }
  func.func @transform_4(%arg0: i32) -> i32 {
    %c0_i32 = arith.constant 0 : i32
    %c0_i32_0 = arith.constant 0 : i32
    return %c0_i32 : i32
  }
  func.func @transform_5(%arg0: i32) -> (i32, i32) {
    %c0_i32 = arith.constant 0 : i32
    %c0_i32_0 = arith.constant 0 : i32
    return %arg0, %c0_i32 : i32, i32
  }
  func.func @transform_6(%arg0: i32) -> (i32, i32) {
    %c0_i32 = arith.constant 0 : i32
    %c0_i32_0 = arith.constant 0 : i32
    return %arg0, %c0_i32 : i32, i32
  }
}

</mosaic_0001>

<llo_original>
// kernel: tpu_custom_call.1
$region0: #{tpu_custom_call.1}
  #allocation0 [shape = 'u32[]', space=smem, size = 0x4, offset = 0x4, fixed_abs, tag = 'smem constant byte address 0x4 - core index']
  #allocation1 [shape = 'u32[144,128]{1,0:T(1,128)}', space=vmem, size = 0x12000, scoped, tag = 'internal scratch']
  #allocation2 [shape = 'f32[1]{0:T(128)S(6)}', space=smem, size = 0x200, scoped, tag = 'scoped memory for tpu_custom_call.1']
  %s0 = inlined_call_operand.vmem [shape: s32[16,16], index: 0, kind: input, shape index: {}]
  %s1 = inlined_call_operand.vmem [shape: f32[64,128], index: 1, kind: input, shape index: {}]
  %s2 = inlined_call_operand.vmem [shape: f32[128,8], index: 2, kind: input, shape index: {}]
  %s3 = inlined_call_operand.vmem [shape: f32[1024,1], index: 3, kind: input, shape index: {}]
  %s4 = inlined_call_operand.<no memory space> [shape: f32[1], index: 4, kind: input, shape index: {}]
  %s5 = inlined_call_operand.vmem [shape: f32[16,1], index: 5, kind: output, shape index: {0}]
  %s6 = inlined_call_operand.hbm [shape: f32[16,128], index: 6, kind: output, shape index: {1}]
  %7 = xla_tuple %s5, %s6
  %s8 = sld [smem:[#allocation0]]
  $region61: #{tpu_custom_call.1} parent=0
    _
  %s10 = ssub.s32 1, %s8
  %s11 = scalar_select 0, %s10, %s8
  %12 = sst [smem:[#allocation2]] %s4
  $region1: #{tpu_custom_call.1} parent=0
    #allocation3 [shape = 'u8[8192]{0}', space=vmem, size = 0x2000, scoped, tag = 'output window, operand 1']
    #allocation4 [shape = 's32[2]{0}', space=sflag, size = 0x8, scoped, tag = 'scoped memory for tpu_custom_call.1']
    %13 = vsyncpa [#allocation4], 0
    %s14 = scalar_lea.sflag [#allocation4], 1
    %15 = vsyncpa %s14, 0
    loop: start=0, step=1, limit=4
    $region2: #{tpu_custom_call.1} parent=1 // loop_pre_header
      _
    $region3: #{tpu_custom_call.1} parent=1 // loop_header
      %s17 = sphi 0, %s21
      %p18 = scmp.ge.s32.totalorder %s17, 4
      %s27 = sphi 0, %s29
      %s30 = sphi 0, %s27
      %s31 = sphi 0, %s30
      %s47 = sphi 0, %s31
      %s51 = sphi 0, %s51
      %s53 = sphi 0, %s51
      %s54 = sphi 0, %s53
      %s68 = sphi 0, %s54
      %s72 = sphi 0, %s72
      %s74 = sphi 0, %s72
      %s75 = sphi 0, %s74
      %s89 = sphi 0, %s75
      %s93 = sphi 0, %s93
      %s95 = sphi 0, %s93
      %s96 = sphi 0, %s95
      %s110 = sphi 0, %s96
      %s114 = sphi 0, %s114
      %s116 = sphi 0, %s114
      %s117 = sphi 0, %s116
      %s131 = sphi 0, %s117
      %s137 = sphi 0, %s139
      %s140 = sphi 0, %s137
      %s141 = sphi 0, %s140
      %s157 = sphi 0, %s141
      %s163 = sphi 0, %s165
      %s166 = sphi 0, %s163
      %s167 = sphi 0, %s166
      %s183 = sphi 0, %s167
    $region4: #{tpu_custom_call.1} parent=1 // loop_header_branch
      %20 = sbr.rel (%p18) target = $region8
    $region5: #{tpu_custom_call.1} parent=1 // loop_body
      %s22 = ssub.s32 %s17, 1
      %s23 = ssub.s32 %s17, 2
      %s24 = sadd.s32 %s17, 1
      %s25 = ssub.s32 %s17, %s24
      %p26 = scmp.eq.s32.totalorder %s25, 0
      %s28 = sadd.s32 %s27, 1
      %s29 = scalar_select %p26, %s27, %s28
      %p32 = pneg %p26
      %p33 = scmp.eq.s32.totalorder %s17, 1
      %p34 = por %p32, %p33
      %p35 = scmp.ne.s32.totalorder %s27, %s30
      %p36 = scmp.eq.s32.totalorder %s17, 0
      %p37 = por %p35, %p36
      %p38 = scmp.ne.s32.totalorder %s27, %s30
      %p39 = scmp.eq.s32.totalorder %s22, 1
      %p40 = por %p38, %p39
      %p41 = scmp.ne.s32.totalorder %s30, %s31
      %p42 = scmp.eq.s32.totalorder %s22, 0
      %p43 = por %p41, %p42
      %p44 = scmp.ne.s32.totalorder %s30, %s31
      %p45 = scmp.eq.s32.totalorder %s23, 1
      %p46 = por %p44, %p45
      %p48 = scmp.ne.s32.totalorder %s31, %s47
      %p49 = scmp.eq.s32.totalorder %s23, 0
      %p50 = por %p48, %p49
      %s52 = sadd.s32 %s51, 1
      %p55 = scmp.eq.s32.totalorder %s17, 1
      %p56 = scmp.ne.s32.totalorder %s51, %s53
      %p57 = scmp.eq.s32.totalorder %s17, 0
      %p58 = por %p56, %p57
      %p59 = scmp.ne.s32.totalorder %s51, %s53
      %p60 = scmp.eq.s32.totalorder %s22, 1
      %p61 = por %p59, %p60
      %p62 = scmp.ne.s32.totalorder %s53, %s54
      %p63 = scmp.eq.s32.totalorder %s22, 0
      %p64 = por %p62, %p63
      %p65 = scmp.ne.s32.totalorder %s53, %s54
      %p66 = scmp.eq.s32.totalorder %s23, 1
      %p67 = por %p65, %p66
      %p69 = scmp.ne.s32.totalorder %s54, %s68
      %p70 = scmp.eq.s32.totalorder %s23, 0
      %p71 = por %p69, %p70
      %s73 = sadd.s32 %s72, 1
      %p76 = scmp.eq.s32.totalorder %s17, 1
      %p77 = scmp.ne.s32.totalorder %s72, %s74
      %p78 = scmp.eq.s32.totalorder %s17, 0
      %p79 = por %p77, %p78
      %p80 = scmp.ne.s32.totalorder %s72, %s74
      %p81 = scmp.eq.s32.totalorder %s22, 1
      %p82 = por %p80, %p81
      %p83 = scmp.ne.s32.totalorder %s74, %s75
      %p84 = scmp.eq.s32.totalorder %s22, 0
      %p85 = por %p83, %p84
      %p86 = scmp.ne.s32.totalorder %s74, %s75
      %p87 = scmp.eq.s32.totalorder %s23, 1
      %p88 = por %p86, %p87
      %p90 = scmp.ne.s32.totalorder %s75, %s89
      %p91 = scmp.eq.s32.totalorder %s23, 0
      %p92 = por %p90, %p91
      %s94 = sadd.s32 %s93, 1
      %p97 = scmp.eq.s32.totalorder %s17, 1
      %p98 = scmp.ne.s32.totalorder %s93, %s95
      %p99 = scmp.eq.s32.totalorder %s17, 0
      %p100 = por %p98, %p99
      %p101 = scmp.ne.s32.totalorder %s93, %s95
      %p102 = scmp.eq.s32.totalorder %s22, 1
      %p103 = por %p101, %p102
      %p104 = scmp.ne.s32.totalorder %s95, %s96
      %p105 = scmp.eq.s32.totalorder %s22, 0
      %p106 = por %p104, %p105
      %p107 = scmp.ne.s32.totalorder %s95, %s96
      %p108 = scmp.eq.s32.totalorder %s23, 1
      %p109 = por %p107, %p108
      %p111 = scmp.ne.s32.totalorder %s96, %s110
      %p112 = scmp.eq.s32.totalorder %s23, 0
      %p113 = por %p111, %p112
      %s115 = sadd.s32 %s114, 1
      %p118 = scmp.eq.s32.totalorder %s17, 1
      %p119 = scmp.ne.s32.totalorder %s114, %s116
      %p120 = scmp.eq.s32.totalorder %s17, 0
      %p121 = por %p119, %p120
      %p122 = scmp.ne.s32.totalorder %s114, %s116
      %p123 = scmp.eq.s32.totalorder %s22, 1
      %p124 = por %p122, %p123
      %p125 = scmp.ne.s32.totalorder %s116, %s117
      %p126 = scmp.eq.s32.totalorder %s22, 0
      %p127 = por %p125, %p126
      %p128 = scmp.ne.s32.totalorder %s116, %s117
      %p129 = scmp.eq.s32.totalorder %s23, 1
      %p130 = por %p128, %p129
      %p132 = scmp.ne.s32.totalorder %s117, %s131
      %p133 = scmp.eq.s32.totalorder %s23, 0
      %p134 = por %p132, %p133
      %s135 = ssub.s32 %s17, %s24
      %p136 = scmp.eq.s32.totalorder %s135, 0
      %s138 = sadd.s32 %s137, 1
      %s139 = scalar_select %p136, %s137, %s138
      %p142 = pneg %p136
      %p143 = scmp.eq.s32.totalorder %s17, 1
      %p144 = por %p142, %p143
      %p145 = scmp.ne.s32.totalorder %s137, %s140
      %p146 = scmp.eq.s32.totalorder %s17, 0
      %p147 = por %p145, %p146
      %p148 = scmp.ne.s32.totalorder %s137, %s140
      %p149 = scmp.eq.s32.totalorder %s22, 1
      %p150 = por %p148, %p149
      %p151 = scmp.ne.s32.totalorder %s140, %s141
      %p152 = scmp.eq.s32.totalorder %s22, 0
      %p153 = por %p151, %p152
      %p154 = scmp.ne.s32.totalorder %s140, %s141
      %p155 = scmp.eq.s32.totalorder %s23, 1
      %p156 = por %p154, %p155
      %p158 = scmp.ne.s32.totalorder %s141, %s157
      %p159 = scmp.eq.s32.totalorder %s23, 0
      %p160 = por %p158, %p159
      %s161 = ssub.s32 %s17, %s24
      %p162 = scmp.eq.s32.totalorder %s161, 0
      %s164 = sadd.s32 %s163, 1
      %s165 = scalar_select %p162, %s163, %s164
      %p168 = pneg %p162
      %p169 = scmp.eq.s32.totalorder %s17, 1
      %p170 = por %p168, %p169
      %p171 = scmp.ne.s32.totalorder %s163, %s166
      %p172 = scmp.eq.s32.totalorder %s17, 0
      %p173 = por %p171, %p172
      %p174 = scmp.ne.s32.totalorder %s163, %s166
      %p175 = scmp.eq.s32.totalorder %s22, 1
      %p176 = por %p174, %p175
      %p177 = scmp.ne.s32.totalorder %s166, %s167
      %p178 = scmp.eq.s32.totalorder %s22, 0
      %p179 = por %p177, %p178
      %p180 = scmp.ne.s32.totalorder %s166, %s167
      %p181 = scmp.eq.s32.totalorder %s23, 1
      %p182 = por %p180, %p181
      %p184 = scmp.ne.s32.totalorder %s167, %s183
      %p185 = scmp.eq.s32.totalorder %s23, 0
      %p186 = por %p184, %p185
      %p187 = scmp.le.s32.totalorder 1, %s17
      %p188 = scmp.lt.s32.totalorder %s17, 3
      %p189 = pnand %p187, %p188
      %p190 = pneg %p189
      // Predicated region
      $region9: #{tpu_custom_call.1} parent=5 // pred_check
        _
      $region10: #{tpu_custom_call.1} parent=5 // pred_check_branch
        %192 = sbr.rel (%p189) target = $region12
      $region11: #{tpu_custom_call.1} parent=5 // pred_region
        %s193 = ssub.s32 %s17, 1
        // Predicated region
        $region13: #{tpu_custom_call.1} parent=11 // pred_check
          %p194 = pneg %p64
        $region14: #{tpu_custom_call.1} parent=11 // pred_check_branch
          %196 = sbr.rel (%p194) target = $region16
        $region15: #{tpu_custom_call.1} parent=11 // pred_region
          _
        $region16: #{tpu_custom_call.1} parent=11 // pred_fallthru
          _
        // Predicated region
        $region17: #{tpu_custom_call.1} parent=11 // pred_check
          %p197 = pneg %p85
        $region18: #{tpu_custom_call.1} parent=11 // pred_check_branch
          %199 = sbr.rel (%p197) target = $region20
        $region19: #{tpu_custom_call.1} parent=11 // pred_region
          _
        $region20: #{tpu_custom_call.1} parent=11 // pred_fallthru
          _
        // Predicated region
        $region21: #{tpu_custom_call.1} parent=11 // pred_check
          %p200 = pneg %p106
        $region22: #{tpu_custom_call.1} parent=11 // pred_check_branch
          %202 = sbr.rel (%p200) target = $region24
        $region23: #{tpu_custom_call.1} parent=11 // pred_region
          _
        $region24: #{tpu_custom_call.1} parent=11 // pred_fallthru
          _
        // Predicated region
        $region25: #{tpu_custom_call.1} parent=11 // pred_check
          %p203 = pneg %p127
        $region26: #{tpu_custom_call.1} parent=11 // pred_check_branch
          %205 = sbr.rel (%p203) target = $region28
        $region27: #{tpu_custom_call.1} parent=11 // pred_region
          _
        $region28: #{tpu_custom_call.1} parent=11 // pred_fallthru
          _
      $region12: #{tpu_custom_call.1} parent=5 // pred_fallthru
        _
      %p206 = scmp.lt.s32.totalorder %s17, 2
      // Predicated region
      $region29: #{tpu_custom_call.1} parent=5 // pred_check
        %p207 = pneg %p206
      $region30: #{tpu_custom_call.1} parent=5 // pred_check_branch
        %209 = sbr.rel (%p207) target = $region32
      $region31: #{tpu_custom_call.1} parent=5 // pred_region
        // Predicated region
        $region33: #{tpu_custom_call.1} parent=31 // pred_check
          %p210 = pneg %p37
        $region34: #{tpu_custom_call.1} parent=31 // pred_check_branch
          %212 = sbr.rel (%p210) target = $region36
        $region35: #{tpu_custom_call.1} parent=31 // pred_region
          %p213 = scmp.lt.s32.totalorder %s17, 1
          %s214 = scalar_select %p213, %s17, 1
          %s215 = smul.addr %s214, 8
          %s216 = scalar_lea.vmem %s0, %s215
        $region36: #{tpu_custom_call.1} parent=31 // pred_fallthru
          _
      $region32: #{tpu_custom_call.1} parent=5 // pred_fallthru
        _
      %p217 = scmp.le.s32.totalorder 1, %s17
      %p218 = scmp.lt.s32.totalorder %s17, 3
      %p219 = pnand %p217, %p218
      %p220 = pneg %p219
      // Predicated region
      $region37: #{tpu_custom_call.1} parent=5 // pred_check
        _
      $region38: #{tpu_custom_call.1} parent=5 // pred_check_branch
        %222 = sbr.rel (%p219) target = $region40
      $region39: #{tpu_custom_call.1} parent=5 // pred_region
        %s223 = ssub.s32 %s17, 1
        %p224 = scmp.lt.s32.totalorder %s22, 1
        %s225 = scalar_select %p224, %s22, 1
        %s226 = smul.addr %s225, 8
        %s227 = scalar_lea.vmem %s0, %s226
        %p228 = pneg %p43
        %p229 = pneg %p40
        %p230 = pneg %p64
        %p231 = pneg %p61
        %p232 = pneg %p85
        %p233 = pneg %p82
        %p234 = pneg %p106
        %p235 = pneg %p103
        %p236 = pneg %p127
        %p237 = pneg %p124
        %p238 = pneg %p153
        %p239 = pneg %p150
        %p240 = scmp.lt.s32.totalorder %s22, 1
        %s241 = scalar_select %p240, %s22, 1
        %s242 = smul.addr %s241, 8
        %s243 = scalar_lea.vmem %s5, %s242
        %p244 = pneg %p179
        %p245 = pneg %p176
        %s246 = sand.u32 %s166, 1
        %s247 = scalar_lea.sflag [#allocation4], %s246
        %s248 = sand.u32 %s166, 1
        %s249 = smul.addr %s248, 8
        %s250 = scalar_lea.vmem [#allocation3], %s249
        %p251 = scmp.lt.s32.totalorder %s22, 1
        %s252 = scalar_select %p251, %s22, 1
        %s253 = smul.addr %s252, 8
        %s254 = scalar_lea.vmem %s0, %s253
        %p255 = scmp.lt.s32.totalorder %s22, 1
        %s256 = scalar_select %p255, %s22, 1
        %s257 = smul.addr %s256, 8
        %s258 = scalar_lea.vmem %s5, %s257
        %v259 = vld [vmem:[%s254] sm:$0xff]
        %v260 = vlaneseq
        %v261 = vshrl.u32 %v260, 7
        %v262 = vsub.s32 0, %v261
        %v263 = vrot.slane %v259, %v262
        %265 = vbcast.lane.b32.xlu0 %v263, 256
        %v266 = vpop.permute.xlu0 %265
        %s268 = sor.u32 256, 8
        %269 = vbcast.lane.b32.xlu0 %v263, %s268
        %v270 = vpop.permute.xlu0 %269
        %v271 = vlaneseq
        %v272 = vshrl.u32 %v271, 7
        %v273 = vsub.s32 1, %v272
        %v274 = vrot.slane %v259, %v273
        %276 = vbcast.lane.b32.xlu0 %v274, 256
        %v277 = vpop.permute.xlu0 %276
        %s279 = sor.u32 256, 8
        %280 = vbcast.lane.b32.xlu0 %v274, %s279
        %v281 = vpop.permute.xlu0 %280
        %v282 = vlaneseq
        %v283 = vshrl.u32 %v282, 7
        %v284 = vsub.s32 2, %v283
        %v285 = vrot.slane %v259, %v284
        %287 = vbcast.lane.b32.xlu0 %v285, 256
        %v288 = vpop.permute.xlu0 %287
        %s290 = sor.u32 256, 8
        %291 = vbcast.lane.b32.xlu0 %v285, %s290
        %v292 = vpop.permute.xlu0 %291
        %v293 = vlaneseq
        %v294 = vshrl.u32 %v293, 7
        %v295 = vsub.s32 3, %v294
        %v296 = vrot.slane %v259, %v295
        %298 = vbcast.lane.b32.xlu0 %v296, 256
        %v299 = vpop.permute.xlu0 %298
        %s301 = sor.u32 256, 8
        %302 = vbcast.lane.b32.xlu0 %v296, %s301
        %v303 = vpop.permute.xlu0 %302
        %v304 = vlaneseq
        %v305 = vshrl.u32 %v304, 7
        %v306 = vsub.s32 4, %v305
        %v307 = vrot.slane %v259, %v306
        %309 = vbcast.lane.b32.xlu0 %v307, 256
        %v310 = vpop.permute.xlu0 %309
        %s312 = sor.u32 256, 8
        %313 = vbcast.lane.b32.xlu0 %v307, %s312
        %v314 = vpop.permute.xlu0 %313
        %v315 = vlaneseq
        %v316 = vshrl.u32 %v315, 7
        %v317 = vsub.s32 5, %v316
        %v318 = vrot.slane %v259, %v317
        %320 = vbcast.lane.b32.xlu0 %v318, 256
        %v321 = vpop.permute.xlu0 %320
        %s323 = sor.u32 256, 8
        %324 = vbcast.lane.b32.xlu0 %v318, %s323
        %v325 = vpop.permute.xlu0 %324
        %v326 = vlaneseq
        %v327 = vshrl.u32 %v326, 7
        %v328 = vsub.s32 6, %v327
        %v329 = vrot.slane %v259, %v328
        %331 = vbcast.lane.b32.xlu0 %v329, 256
        %v332 = vpop.permute.xlu0 %331
        %s334 = sor.u32 256, 8
        %335 = vbcast.lane.b32.xlu0 %v329, %s334
        %v336 = vpop.permute.xlu0 %335
        %v337 = vlaneseq
        %v338 = vshrl.u32 %v337, 7
        %v339 = vsub.s32 7, %v338
        %v340 = vrot.slane %v259, %v339
        %342 = vbcast.lane.b32.xlu0 %v340, 256
        %v343 = vpop.permute.xlu0 %342
        %s345 = sor.u32 256, 8
        %346 = vbcast.lane.b32.xlu0 %v340, %s345
        %v347 = vpop.permute.xlu0 %346
        %v348 = vlaneseq
        %v349 = vand.u32 %v348, 127
        %vm350 = vcmp.eq.s32.totalorder %v266, %v349
        %vm351 = vcmp.eq.s32.totalorder %v270, %v349
        %vm352 = vcmp.eq.s32.totalorder %v277, %v349
        %vm353 = vcmp.eq.s32.totalorder %v281, %v349
        %vm354 = vcmp.eq.s32.totalorder %v288, %v349
        %vm355 = vcmp.eq.s32.totalorder %v292, %v349
        %vm356 = vcmp.eq.s32.totalorder %v299, %v349
        %vm357 = vcmp.eq.s32.totalorder %v303, %v349
        %vm358 = vcmp.eq.s32.totalorder %v310, %v349
        %vm359 = vcmp.eq.s32.totalorder %v314, %v349
        %vm360 = vcmp.eq.s32.totalorder %v321, %v349
        %vm361 = vcmp.eq.s32.totalorder %v325, %v349
        %vm362 = vcmp.eq.s32.totalorder %v332, %v349
        %vm363 = vcmp.eq.s32.totalorder %v336, %v349
        %vm364 = vcmp.eq.s32.totalorder %v343, %v349
        %vm365 = vcmp.eq.s32.totalorder %v347, %v349
        %v366 = vsel %vm350, 1, 0
        %v367 = vsel %vm351, 1, 0
        %v368 = vsel %vm352, 1, 0
        %v369 = vsel %vm353, 1, 0
        %v370 = vsel %vm354, 1, 0
        %v371 = vsel %vm355, 1, 0
        %v372 = vsel %vm356, 1, 0
        %v373 = vsel %vm357, 1, 0
        %v374 = vsel %vm358, 1, 0
        %v375 = vsel %vm359, 1, 0
        %v376 = vsel %vm360, 1, 0
        %v377 = vsel %vm361, 1, 0
        %v378 = vsel %vm362, 1, 0
        %v379 = vsel %vm363, 1, 0
        %v380 = vsel %vm364, 1, 0
        %v381 = vsel %vm365, 1, 0
        %v382 = vcvt.s32.f32 %v366
        %v383 = vcvt.s32.f32 %v367
        %v384 = vcvt.s32.f32 %v368
        %v385 = vcvt.s32.f32 %v369
        %v386 = vcvt.s32.f32 %v370
        %v387 = vcvt.s32.f32 %v371
        %v388 = vcvt.s32.f32 %v372
        %v389 = vcvt.s32.f32 %v373
        %v390 = vcvt.s32.f32 %v374
        %v391 = vcvt.s32.f32 %v375
        %v392 = vcvt.s32.f32 %v376
        %v393 = vcvt.s32.f32 %v377
        %v394 = vcvt.s32.f32 %v378
        %v395 = vcvt.s32.f32 %v379
        %v396 = vcvt.s32.f32 %v380
        %v397 = vcvt.s32.f32 %v381
        %v398 = vld [vmem:[%s1] sm:$0xff]
        %v399 = vld [vmem:[%s1 + $0x8] sm:$0xff]
        %v400 = vld [vmem:[%s1 + $0x10] sm:$0xff]
        %v401 = vld [vmem:[%s1 + $0x18] sm:$0xff]
        %v402 = vld [vmem:[%s1 + $0x20] sm:$0xff]
        %v403 = vld [vmem:[%s1 + $0x28] sm:$0xff]
        %v404 = vld [vmem:[%s1 + $0x30] sm:$0xff]
        %v405 = vld [vmem:[%s1 + $0x38] sm:$0xff]
        %vm406 = vcmask 523264
        %v408 = vsel %vm406, %v382, 0
        %v411 = vsel %vm406, %v383, 0
        %v414 = vsel %vm406, %v384, 0
        %v417 = vsel %vm406, %v385, 0
        %v420 = vsel %vm406, %v386, 0
        %v423 = vsel %vm406, %v387, 0
        %v426 = vsel %vm406, %v388, 0
        %v429 = vsel %vm406, %v389, 0
        %v432 = vsel %vm406, %v390, 0
        %v435 = vsel %vm406, %v391, 0
        %v438 = vsel %vm406, %v392, 0
        %v441 = vsel %vm406, %v393, 0
        %v444 = vsel %vm406, %v394, 0
        %v447 = vsel %vm406, %v395, 0
        %v450 = vsel %vm406, %v396, 0
        %v453 = vsel %vm406, %v397, 0
        %455 = vmatprep.subr.mxu0 0.0
        %456 = vmatpush1.msra.mxu0 %v398
        %457 = vmatprep.subr.mxu0 0.0
        %458 = vmatpush1.msra.mxu0 %v399
        %459 = vmatprep.subr.mxu0 0.0
        %460 = vmatpush1.msra.mxu0 %v400
        %461 = vmatprep.subr.mxu0 0.0
        %462 = vmatpush1.msra.mxu0 %v401
        %463 = vmatprep.subr.mxu0 0.0
        %464 = vmatpush1.msra.mxu0 %v402
        %465 = vmatprep.subr.mxu0 0.0
        %466 = vmatpush1.msra.mxu0 %v403
        %467 = vmatprep.subr.mxu0 0.0
        %468 = vmatpush1.msra.mxu0 %v404
        %469 = vmatprep.subr.mxu0 0.0
        %470 = vmatpush1.msra.mxu0 %v405
        %471 = vmatprep.subr.mxu0 0.0
        %472 = vmatpush1.msra.mxu0 0.0
        %473 = vmatprep.subr.mxu0 0.0
        %474 = vmatpush1.msra.mxu0 0.0
        %475 = vmatprep.subr.mxu0 0.0
        %476 = vmatpush1.msra.mxu0 0.0
        %477 = vmatprep.subr.mxu0 0.0
        %478 = vmatpush1.msra.mxu0 0.0
        %479 = vmatprep.subr.mxu0 0.0
        %480 = vmatpush1.msra.mxu0 0.0
        %481 = vmatprep.subr.mxu0 0.0
        %482 = vmatpush1.msra.mxu0 0.0
        %483 = vmatprep.subr.mxu0 0.0
        %484 = vmatpush1.msra.mxu0 0.0
        %485 = vmatprep.subr.mxu0 0.0
        %486 = vmatpush1.msra.mxu0 0.0
        %487 = vmatprep.subr.mxu0 0.0
        %488 = vmatpush1.msra.mxu0 0.0
        %489 = vmatprep.subr.mxu0 0.0
        %490 = vmatpush1.msra.mxu0 0.0
        %491 = vmatprep.subr.mxu0 0.0
        %492 = vmatpush1.msra.mxu0 0.0
        %493 = vmatprep.subr.mxu0 0.0
        %494 = vmatpush1.msra.mxu0 0.0
        %495 = vmatprep.subr.mxu0 0.0
        %496 = vmatpush1.msra.mxu0 0.0
        %497 = vmatprep.subr.mxu0 0.0
        %498 = vmatpush1.msra.mxu0 0.0
        %499 = vmatprep.subr.mxu0 0.0
        %500 = vmatpush1.msra.mxu0 0.0
        %501 = vmatprep.subr.mxu0 0.0
        %502 = vmatpush1.msra.mxu0 0.0
        %503 = vmatprep.subr.mxu0 0.0
        %504 = vmatpush1.msra.mxu0 0.0
        %505 = vmatprep.subr.mxu0 0.0
        %506 = vmatpush1.msra.mxu0 0.0
        %507 = vmatprep.subr.mxu0 0.0
        %508 = vmatpush1.msra.mxu0 0.0
        %509 = vmatprep.subr.mxu0 0.0
        %510 = vmatpush1.msra.mxu0 0.0
        %511 = vmatprep.subr.mxu0 0.0
        %512 = vmatpush1.msra.mxu0 0.0
        %513 = vmatprep.subr.mxu0 0.0
        %514 = vmatpush1.msra.mxu0 0.0
        %515 = vmatprep.subr.mxu0 0.0
        %516 = vmatpush1.msra.mxu0 0.0
        %517 = vmatprep.subr.mxu0 0.0
        %518 = vmatpush1.msra.mxu0 0.0
        %519 = vmatprep.mubr.f32.mxu0 0.0
        %520 = vmatmul.mubr.f32.gmra.mrb[0].mxu0 %v408
        %v521 = vpop.f32.mrb[0].mxu0
        %v522 = vadd.f32 0.0, %v521
        %v523 = vpop.f32.mrb[0].mxu0
        %524 = vmatprep.mubr.f32.mxu0 0.0
        %525 = vmatmul.mubr.f32.gmra.mrb[0].mxu0 %v411
        %v526 = vpop.f32.mrb[0].mxu0
        %v527 = vadd.f32 0.0, %v526
        %v528 = vpop.f32.mrb[0].mxu0
        %529 = vmatprep.mubr.f32.mxu0 0.0
        %530 = vmatmul.mubr.f32.gmra.mrb[0].mxu0 %v414
        %v531 = vpop.f32.mrb[0].mxu0
        %v532 = vadd.f32 0.0, %v531
        %v533 = vpop.f32.mrb[0].mxu0
        %534 = vmatprep.mubr.f32.mxu0 0.0
        %535 = vmatmul.mubr.f32.gmra.mrb[0].mxu0 %v417
        %v536 = vpop.f32.mrb[0].mxu0
        %v537 = vadd.f32 0.0, %v536
        %v538 = vpop.f32.mrb[0].mxu0
        %539 = vmatprep.mubr.f32.mxu0 0.0
        %540 = vmatmul.mubr.f32.gmra.mrb[0].mxu0 %v420
        %v541 = vpop.f32.mrb[0].mxu0
        %v542 = vadd.f32 0.0, %v541
        %v543 = vpop.f32.mrb[0].mxu0
        %544 = vmatprep.mubr.f32.mxu0 0.0
        %545 = vmatmul.mubr.f32.gmra.mrb[0].mxu0 %v423
        %v546 = vpop.f32.mrb[0].mxu0
        %v547 = vadd.f32 0.0, %v546
        %v548 = vpop.f32.mrb[0].mxu0
        %549 = vmatprep.mubr.f32.mxu0 0.0
        %550 = vmatmul.mubr.f32.gmra.mrb[0].mxu0 %v426
        %v551 = vpop.f32.mrb[0].mxu0
        %v552 = vadd.f32 0.0, %v551
        %v553 = vpop.f32.mrb[0].mxu0
        %554 = vmatprep.mubr.f32.mxu0 0.0
        %555 = vmatmul.mubr.f32.gmra.mrb[0].mxu0 %v429
        %v556 = vpop.f32.mrb[0].mxu0
        %v557 = vadd.f32 0.0, %v556
        %v558 = vpop.f32.mrb[0].mxu0
        %559 = vmatprep.mubr.f32.mxu0 0.0
        %560 = vmatmul.mubr.f32.gmra.mrb[0].mxu0 %v432
        %v561 = vpop.f32.mrb[0].mxu0
        %v562 = vadd.f32 0.0, %v561
        %v563 = vpop.f32.mrb[0].mxu0
        %564 = vmatprep.mubr.f32.mxu0 0.0
        %565 = vmatmul.mubr.f32.gmra.mrb[0].mxu0 %v435
        %v566 = vpop.f32.mrb[0].mxu0
        %v567 = vadd.f32 0.0, %v566
        %v568 = vpop.f32.mrb[0].mxu0
        %569 = vmatprep.mubr.f32.mxu0 0.0
        %570 = vmatmul.mubr.f32.gmra.mrb[0].mxu0 %v438
        %v571 = vpop.f32.mrb[0].mxu0
        %v572 = vadd.f32 0.0, %v571
        %v573 = vpop.f32.mrb[0].mxu0
        %574 = vmatprep.mubr.f32.mxu0 0.0
        %575 = vmatmul.mubr.f32.gmra.mrb[0].mxu0 %v441
        %v576 = vpop.f32.mrb[0].mxu0
        %v577 = vadd.f32 0.0, %v576
        %v578 = vpop.f32.mrb[0].mxu0
        %579 = vmatprep.mubr.f32.mxu0 0.0
        %580 = vmatmul.mubr.f32.gmra.mrb[0].mxu0 %v444
        %v581 = vpop.f32.mrb[0].mxu0
        %v582 = vadd.f32 0.0, %v581
        %v583 = vpop.f32.mrb[0].mxu0
        %584 = vmatprep.mubr.f32.mxu0 0.0
        %585 = vmatmul.mubr.f32.gmra.mrb[0].mxu0 %v447
        %v586 = vpop.f32.mrb[0].mxu0
        %v587 = vadd.f32 0.0, %v586
        %v588 = vpop.f32.mrb[0].mxu0
        %589 = vmatprep.mubr.f32.mxu0 0.0
        %590 = vmatmul.mubr.f32.gmra.mrb[0].mxu0 %v450
        %v591 = vpop.f32.mrb[0].mxu0
        %v592 = vadd.f32 0.0, %v591
        %v593 = vpop.f32.mrb[0].mxu0
        %594 = vmatprep.mubr.f32.mxu0 0.0
        %595 = vmatmul.mubr.f32.gmra.mrb[0].mxu0 %v453
        %v596 = vpop.f32.mrb[0].mxu0
        %v597 = vadd.f32 0.0, %v596
        %v598 = vpop.f32.mrb[0].mxu0
        %599 = vdwg.mxu0
        %v600 = vld [vmem:[%s2] sm:$0xff]
        %v601 = vld [vmem:[%s2 + $0x8] sm:$0xff]
        %v602 = vld [vmem:[%s2 + $0x10] sm:$0xff]
        %v603 = vld [vmem:[%s2 + $0x18] sm:$0xff]
        %v604 = vld [vmem:[%s2 + $0x20] sm:$0xff]
        %v605 = vld [vmem:[%s2 + $0x28] sm:$0xff]
        %v606 = vld [vmem:[%s2 + $0x30] sm:$0xff]
        %v607 = vld [vmem:[%s2 + $0x38] sm:$0xff]
        %v608 = vld [vmem:[%s2 + $0x40] sm:$0xff]
        %v609 = vld [vmem:[%s2 + $0x48] sm:$0xff]
        %v610 = vld [vmem:[%s2 + $0x50] sm:$0xff]
        %v611 = vld [vmem:[%s2 + $0x58] sm:$0xff]
        %v612 = vld [vmem:[%s2 + $0x60] sm:$0xff]
        %v613 = vld [vmem:[%s2 + $0x68] sm:$0xff]
        %v614 = vld [vmem:[%s2 + $0x70] sm:$0xff]
        %v615 = vld [vmem:[%s2 + $0x78] sm:$0xff]
        %616 = vmatprep.subr.mxu0 0.0
        %617 = vmatpush1.msra.mxu0 %v600
        %618 = vmatprep.subr.mxu0 0.0
        %619 = vmatpush1.msra.mxu0 %v601
        %620 = vmatprep.subr.mxu0 0.0
        %621 = vmatpush1.msra.mxu0 %v602
        %622 = vmatprep.subr.mxu0 0.0
        %623 = vmatpush1.msra.mxu0 %v603
        %624 = vmatprep.subr.mxu0 0.0
        %625 = vmatpush1.msra.mxu0 %v604
        %626 = vmatprep.subr.mxu0 0.0
        %627 = vmatpush1.msra.mxu0 %v605
        %628 = vmatprep.subr.mxu0 0.0
        %629 = vmatpush1.msra.mxu0 %v606
        %630 = vmatprep.subr.mxu0 0.0
        %631 = vmatpush1.msra.mxu0 %v607
        %632 = vmatprep.subr.mxu0 0.0
        %633 = vmatpush1.msra.mxu0 %v608
        %634 = vmatprep.subr.mxu0 0.0
        %635 = vmatpush1.msra.mxu0 %v609
        %636 = vmatprep.subr.mxu0 0.0
        %637 = vmatpush1.msra.mxu0 %v610
        %638 = vmatprep.subr.mxu0 0.0
        %639 = vmatpush1.msra.mxu0 %v611
        %640 = vmatprep.subr.mxu0 0.0
        %641 = vmatpush1.msra.mxu0 %v612
        %642 = vmatprep.subr.mxu0 0.0
        %643 = vmatpush1.msra.mxu0 %v613
        %644 = vmatprep.subr.mxu0 0.0
        %645 = vmatpush1.msra.mxu0 %v614
        %646 = vmatprep.subr.mxu0 0.0
        %647 = vmatpush1.msra.mxu0 %v615
        %648 = vmatprep.subr.mxu0 0.0
        %649 = vmatpush1.msra.mxu0 0.0
        %650 = vmatprep.subr.mxu0 0.0
        %651 = vmatpush1.msra.mxu0 0.0
        %652 = vmatprep.subr.mxu0 0.0
        %653 = vmatpush1.msra.mxu0 0.0
        %654 = vmatprep.subr.mxu0 0.0
        %655 = vmatpush1.msra.mxu0 0.0
        %656 = vmatprep.subr.mxu0 0.0
        %657 = vmatpush1.msra.mxu0 0.0
        %658 = vmatprep.subr.mxu0 0.0
        %659 = vmatpush1.msra.mxu0 0.0
        %660 = vmatprep.subr.mxu0 0.0
        %661 = vmatpush1.msra.mxu0 0.0
        %662 = vmatprep.subr.mxu0 0.0
        %663 = vmatpush1.msra.mxu0 0.0
        %664 = vmatprep.subr.mxu0 0.0
        %665 = vmatpush1.msra.mxu0 0.0
        %666 = vmatprep.subr.mxu0 0.0
        %667 = vmatpush1.msra.mxu0 0.0
        %668 = vmatprep.subr.mxu0 0.0
        %669 = vmatpush1.msra.mxu0 0.0
        %670 = vmatprep.subr.mxu0 0.0
        %671 = vmatpush1.msra.mxu0 0.0
        %672 = vmatprep.subr.mxu0 0.0
        %673 = vmatpush1.msra.mxu0 0.0
        %674 = vmatprep.subr.mxu0 0.0
        %675 = vmatpush1.msra.mxu0 0.0
        %676 = vmatprep.subr.mxu0 0.0
        %677 = vmatpush1.msra.mxu0 0.0
        %678 = vmatprep.subr.mxu0 0.0
        %679 = vmatpush1.msra.mxu0 0.0
        %680 = vmatprep.mubr.f32.mxu0 0.0
        %681 = vmatmul.mubr.f32.gmra.mrb[0].mxu0 %v522
        %v682 = vpop.f32.mrb[0].mxu0
        %v683 = vadd.f32 0.0, %v682
        %v684 = vpop.f32.mrb[0].mxu0
        %685 = vmatprep.mubr.f32.mxu0 0.0
        %686 = vmatmul.mubr.f32.gmra.mrb[0].mxu0 %v527
        %v687 = vpop.f32.mrb[0].mxu0
        %v688 = vadd.f32 0.0, %v687
        %v689 = vpop.f32.mrb[0].mxu0
        %690 = vmatprep.mubr.f32.mxu0 0.0
        %691 = vmatmul.mubr.f32.gmra.mrb[0].mxu0 %v532
        %v692 = vpop.f32.mrb[0].mxu0
        %v693 = vadd.f32 0.0, %v692
        %v694 = vpop.f32.mrb[0].mxu0
        %695 = vmatprep.mubr.f32.mxu0 0.0
        %696 = vmatmul.mubr.f32.gmra.mrb[0].mxu0 %v537
        %v697 = vpop.f32.mrb[0].mxu0
        %v698 = vadd.f32 0.0, %v697
        %v699 = vpop.f32.mrb[0].mxu0
        %700 = vmatprep.mubr.f32.mxu0 0.0
        %701 = vmatmul.mubr.f32.gmra.mrb[0].mxu0 %v542
        %v702 = vpop.f32.mrb[0].mxu0
        %v703 = vadd.f32 0.0, %v702
        %v704 = vpop.f32.mrb[0].mxu0
        %705 = vmatprep.mubr.f32.mxu0 0.0
        %706 = vmatmul.mubr.f32.gmra.mrb[0].mxu0 %v547
        %v707 = vpop.f32.mrb[0].mxu0
        %v708 = vadd.f32 0.0, %v707
        %v709 = vpop.f32.mrb[0].mxu0
        %710 = vmatprep.mubr.f32.mxu0 0.0
        %711 = vmatmul.mubr.f32.gmra.mrb[0].mxu0 %v552
        %v712 = vpop.f32.mrb[0].mxu0
        %v713 = vadd.f32 0.0, %v712
        %v714 = vpop.f32.mrb[0].mxu0
        %715 = vmatprep.mubr.f32.mxu0 0.0
        %716 = vmatmul.mubr.f32.gmra.mrb[0].mxu0 %v557
        %v717 = vpop.f32.mrb[0].mxu0
        %v718 = vadd.f32 0.0, %v717
        %v719 = vpop.f32.mrb[0].mxu0
        %720 = vmatprep.mubr.f32.mxu0 0.0
        %721 = vmatmul.mubr.f32.gmra.mrb[0].mxu0 %v562
        %v722 = vpop.f32.mrb[0].mxu0
        %v723 = vadd.f32 0.0, %v722
        %v724 = vpop.f32.mrb[0].mxu0
        %725 = vmatprep.mubr.f32.mxu0 0.0
        %726 = vmatmul.mubr.f32.gmra.mrb[0].mxu0 %v567
        %v727 = vpop.f32.mrb[0].mxu0
        %v728 = vadd.f32 0.0, %v727
        %v729 = vpop.f32.mrb[0].mxu0
        %730 = vmatprep.mubr.f32.mxu0 0.0
        %731 = vmatmul.mubr.f32.gmra.mrb[0].mxu0 %v572
        %v732 = vpop.f32.mrb[0].mxu0
        %v733 = vadd.f32 0.0, %v732
        %v734 = vpop.f32.mrb[0].mxu0
        %735 = vmatprep.mubr.f32.mxu0 0.0
        %736 = vmatmul.mubr.f32.gmra.mrb[0].mxu0 %v577
        %v737 = vpop.f32.mrb[0].mxu0
        %v738 = vadd.f32 0.0, %v737
        %v739 = vpop.f32.mrb[0].mxu0
        %740 = vmatprep.mubr.f32.mxu0 0.0
        %741 = vmatmul.mubr.f32.gmra.mrb[0].mxu0 %v582
        %v742 = vpop.f32.mrb[0].mxu0
        %v743 = vadd.f32 0.0, %v742
        %v744 = vpop.f32.mrb[0].mxu0
        %745 = vmatprep.mubr.f32.mxu0 0.0
        %746 = vmatmul.mubr.f32.gmra.mrb[0].mxu0 %v587
        %v747 = vpop.f32.mrb[0].mxu0
        %v748 = vadd.f32 0.0, %v747
        %v749 = vpop.f32.mrb[0].mxu0
        %750 = vmatprep.mubr.f32.mxu0 0.0
        %751 = vmatmul.mubr.f32.gmra.mrb[0].mxu0 %v592
        %v752 = vpop.f32.mrb[0].mxu0
        %v753 = vadd.f32 0.0, %v752
        %v754 = vpop.f32.mrb[0].mxu0
        %755 = vmatprep.mubr.f32.mxu0 0.0
        %756 = vmatmul.mubr.f32.gmra.mrb[0].mxu0 %v597
        %v757 = vpop.f32.mrb[0].mxu0
        %v758 = vadd.f32 0.0, %v757
        %v759 = vpop.f32.mrb[0].mxu0
        %760 = vdwg.mxu0
        %761 = vxpose.xlu0.b32.start [1/16] %v683, 128
        %762 = vxpose.xlu0.b32.cont [2/16] %v688, 128
        %763 = vxpose.xlu0.b32.cont [3/16] 0.0, 128
        %764 = vxpose.xlu0.b32.cont [4/16] 0.0, 128
        %765 = vxpose.xlu0.b32.cont [5/16] 0.0, 128
        %766 = vxpose.xlu0.b32.cont [6/16] 0.0, 128
        %767 = vxpose.xlu0.b32.cont [7/16] 0.0, 128
        %768 = vxpose.xlu0.b32.cont [8/16] 0.0, 128
        %769 = vxpose.xlu0.b32.cont [9/16] 0.0, 128
        %770 = vxpose.xlu0.b32.cont [10/16] 0.0, 128
        %771 = vxpose.xlu0.b32.cont [11/16] 0.0, 128
        %772 = vxpose.xlu0.b32.cont [12/16] 0.0, 128
        %773 = vxpose.xlu0.b32.cont [13/16] 0.0, 128
        %774 = vxpose.xlu0.b32.cont [14/16] 0.0, 128
        %775 = vxpose.xlu0.b32.cont [15/16] 0.0, 128
        %776 = vxpose.xlu0.b32.end [16/16] 0.0, 128
        %v777 = vpop.trf.xlu0
        %v778 = vpop.trf.xlu0
        %v779 = vpop.trf.xlu0
        %v780 = vpop.trf.xlu0
        %v781 = vpop.trf.xlu0
        %v782 = vpop.trf.xlu0
        %v783 = vpop.trf.xlu0
        %v784 = vpop.trf.xlu0
        %v785 = vpop.trf.xlu0
        %v786 = vpop.trf.xlu0
        %v787 = vpop.trf.xlu0
        %v788 = vpop.trf.xlu0
        %v789 = vpop.trf.xlu0
        %v790 = vpop.trf.xlu0
        %v791 = vpop.trf.xlu0
        %v792 = vpop.trf.xlu0
        %793 = vxpose.xlu0.b32.start [1/16] %v693, 128
        %794 = vxpose.xlu0.b32.cont [2/16] %v698, 128
        %795 = vxpose.xlu0.b32.cont [3/16] 0.0, 128
        %796 = vxpose.xlu0.b32.cont [4/16] 0.0, 128
        %797 = vxpose.xlu0.b32.cont [5/16] 0.0, 128
        %798 = vxpose.xlu0.b32.cont [6/16] 0.0, 128
        %799 = vxpose.xlu0.b32.cont [7/16] 0.0, 128
        %800 = vxpose.xlu0.b32.cont [8/16] 0.0, 128
        %801 = vxpose.xlu0.b32.cont [9/16] 0.0, 128
        %802 = vxpose.xlu0.b32.cont [10/16] 0.0, 128
        %803 = vxpose.xlu0.b32.cont [11/16] 0.0, 128
        %804 = vxpose.xlu0.b32.cont [12/16] 0.0, 128
        %805 = vxpose.xlu0.b32.cont [13/16] 0.0, 128
        %806 = vxpose.xlu0.b32.cont [14/16] 0.0, 128
        %807 = vxpose.xlu0.b32.cont [15/16] 0.0, 128
        %808 = vxpose.xlu0.b32.end [16/16] 0.0, 128
        %v809 = vpop.trf.xlu0
        %v810 = vpop.trf.xlu0
        %v811 = vpop.trf.xlu0
        %v812 = vpop.trf.xlu0
        %v813 = vpop.trf.xlu0
        %v814 = vpop.trf.xlu0
        %v815 = vpop.trf.xlu0
        %v816 = vpop.trf.xlu0
        %v817 = vpop.trf.xlu0
        %v818 = vpop.trf.xlu0
        %v819 = vpop.trf.xlu0
        %v820 = vpop.trf.xlu0
        %v821 = vpop.trf.xlu0
        %v822 = vpop.trf.xlu0
        %v823 = vpop.trf.xlu0
        %v824 = vpop.trf.xlu0
        %825 = vxpose.xlu0.b32.start [1/16] %v703, 128
        %826 = vxpose.xlu0.b32.cont [2/16] %v708, 128
        %827 = vxpose.xlu0.b32.cont [3/16] 0.0, 128
        %828 = vxpose.xlu0.b32.cont [4/16] 0.0, 128
        %829 = vxpose.xlu0.b32.cont [5/16] 0.0, 128
        %830 = vxpose.xlu0.b32.cont [6/16] 0.0, 128
        %831 = vxpose.xlu0.b32.cont [7/16] 0.0, 128
        %832 = vxpose.xlu0.b32.cont [8/16] 0.0, 128
        %833 = vxpose.xlu0.b32.cont [9/16] 0.0, 128
        %834 = vxpose.xlu0.b32.cont [10/16] 0.0, 128
        %835 = vxpose.xlu0.b32.cont [11/16] 0.0, 128
        %836 = vxpose.xlu0.b32.cont [12/16] 0.0, 128
        %837 = vxpose.xlu0.b32.cont [13/16] 0.0, 128
        %838 = vxpose.xlu0.b32.cont [14/16] 0.0, 128
        %839 = vxpose.xlu0.b32.cont [15/16] 0.0, 128
        %840 = vxpose.xlu0.b32.end [16/16] 0.0, 128
        %v841 = vpop.trf.xlu0
        %v842 = vpop.trf.xlu0
        %v843 = vpop.trf.xlu0
        %v844 = vpop.trf.xlu0
        %v845 = vpop.trf.xlu0
        %v846 = vpop.trf.xlu0
        %v847 = vpop.trf.xlu0
        %v848 = vpop.trf.xlu0
        %v849 = vpop.trf.xlu0
        %v850 = vpop.trf.xlu0
        %v851 = vpop.trf.xlu0
        %v852 = vpop.trf.xlu0
        %v853 = vpop.trf.xlu0
        %v854 = vpop.trf.xlu0
        %v855 = vpop.trf.xlu0
        %v856 = vpop.trf.xlu0
        %857 = vxpose.xlu0.b32.start [1/16] %v713, 128
        %858 = vxpose.xlu0.b32.cont [2/16] %v718, 128
        %859 = vxpose.xlu0.b32.cont [3/16] 0.0, 128
        %860 = vxpose.xlu0.b32.cont [4/16] 0.0, 128
        %861 = vxpose.xlu0.b32.cont [5/16] 0.0, 128
        %862 = vxpose.xlu0.b32.cont [6/16] 0.0, 128
        %863 = vxpose.xlu0.b32.cont [7/16] 0.0, 128
        %864 = vxpose.xlu0.b32.cont [8/16] 0.0, 128
        %865 = vxpose.xlu0.b32.cont [9/16] 0.0, 128
        %866 = vxpose.xlu0.b32.cont [10/16] 0.0, 128
        %867 = vxpose.xlu0.b32.cont [11/16] 0.0, 128
        %868 = vxpose.xlu0.b32.cont [12/16] 0.0, 128
        %869 = vxpose.xlu0.b32.cont [13/16] 0.0, 128
        %870 = vxpose.xlu0.b32.cont [14/16] 0.0, 128
        %871 = vxpose.xlu0.b32.cont [15/16] 0.0, 128
        %872 = vxpose.xlu0.b32.end [16/16] 0.0, 128
        %v873 = vpop.trf.xlu0
        %v874 = vpop.trf.xlu0
        %v875 = vpop.trf.xlu0
        %v876 = vpop.trf.xlu0
        %v877 = vpop.trf.xlu0
        %v878 = vpop.trf.xlu0
        %v879 = vpop.trf.xlu0
        %v880 = vpop.trf.xlu0
        %v881 = vpop.trf.xlu0
        %v882 = vpop.trf.xlu0
        %v883 = vpop.trf.xlu0
        %v884 = vpop.trf.xlu0
        %v885 = vpop.trf.xlu0
        %v886 = vpop.trf.xlu0
        %v887 = vpop.trf.xlu0
        %v888 = vpop.trf.xlu0
        %889 = vxpose.xlu0.b32.start [1/16] %v723, 128
        %890 = vxpose.xlu0.b32.cont [2/16] %v728, 128
        %891 = vxpose.xlu0.b32.cont [3/16] 0.0, 128
        %892 = vxpose.xlu0.b32.cont [4/16] 0.0, 128
        %893 = vxpose.xlu0.b32.cont [5/16] 0.0, 128
        %894 = vxpose.xlu0.b32.cont [6/16] 0.0, 128
        %895 = vxpose.xlu0.b32.cont [7/16] 0.0, 128
        %896 = vxpose.xlu0.b32.cont [8/16] 0.0, 128
        %897 = vxpose.xlu0.b32.cont [9/16] 0.0, 128
        %898 = vxpose.xlu0.b32.cont [10/16] 0.0, 128
        %899 = vxpose.xlu0.b32.cont [11/16] 0.0, 128
        %900 = vxpose.xlu0.b32.cont [12/16] 0.0, 128
        %901 = vxpose.xlu0.b32.cont [13/16] 0.0, 128
        %902 = vxpose.xlu0.b32.cont [14/16] 0.0, 128
        %903 = vxpose.xlu0.b32.cont [15/16] 0.0, 128
        %904 = vxpose.xlu0.b32.end [16/16] 0.0, 128
        %v905 = vpop.trf.xlu0
        %v906 = vpop.trf.xlu0
        %v907 = vpop.trf.xlu0
        %v908 = vpop.trf.xlu0
        %v909 = vpop.trf.xlu0
        %v910 = vpop.trf.xlu0
        %v911 = vpop.trf.xlu0
        %v912 = vpop.trf.xlu0
        %v913 = vpop.trf.xlu0
        %v914 = vpop.trf.xlu0
        %v915 = vpop.trf.xlu0
        %v916 = vpop.trf.xlu0
        %v917 = vpop.trf.xlu0
        %v918 = vpop.trf.xlu0
        %v919 = vpop.trf.xlu0
        %v920 = vpop.trf.xlu0
        %921 = vxpose.xlu0.b32.start [1/16] %v733, 128
        %922 = vxpose.xlu0.b32.cont [2/16] %v738, 128
        %923 = vxpose.xlu0.b32.cont [3/16] 0.0, 128
        %924 = vxpose.xlu0.b32.cont [4/16] 0.0, 128
        %925 = vxpose.xlu0.b32.cont [5/16] 0.0, 128
        %926 = vxpose.xlu0.b32.cont [6/16] 0.0, 128
        %927 = vxpose.xlu0.b32.cont [7/16] 0.0, 128
        %928 = vxpose.xlu0.b32.cont [8/16] 0.0, 128
        %929 = vxpose.xlu0.b32.cont [9/16] 0.0, 128
        %930 = vxpose.xlu0.b32.cont [10/16] 0.0, 128
        %931 = vxpose.xlu0.b32.cont [11/16] 0.0, 128
        %932 = vxpose.xlu0.b32.cont [12/16] 0.0, 128
        %933 = vxpose.xlu0.b32.cont [13/16] 0.0, 128
        %934 = vxpose.xlu0.b32.cont [14/16] 0.0, 128
        %935 = vxpose.xlu0.b32.cont [15/16] 0.0, 128
        %936 = vxpose.xlu0.b32.end [16/16] 0.0, 128
        %v937 = vpop.trf.xlu0
        %v938 = vpop.trf.xlu0
        %v939 = vpop.trf.xlu0
        %v940 = vpop.trf.xlu0
        %v941 = vpop.trf.xlu0
        %v942 = vpop.trf.xlu0
        %v943 = vpop.trf.xlu0
        %v944 = vpop.trf.xlu0
        %v945 = vpop.trf.xlu0
        %v946 = vpop.trf.xlu0
        %v947 = vpop.trf.xlu0
        %v948 = vpop.trf.xlu0
        %v949 = vpop.trf.xlu0
        %v950 = vpop.trf.xlu0
        %v951 = vpop.trf.xlu0
        %v952 = vpop.trf.xlu0
        %953 = vxpose.xlu0.b32.start [1/16] %v743, 128
        %954 = vxpose.xlu0.b32.cont [2/16] %v748, 128
        %955 = vxpose.xlu0.b32.cont [3/16] 0.0, 128
        %956 = vxpose.xlu0.b32.cont [4/16] 0.0, 128
        %957 = vxpose.xlu0.b32.cont [5/16] 0.0, 128
        %958 = vxpose.xlu0.b32.cont [6/16] 0.0, 128
        %959 = vxpose.xlu0.b32.cont [7/16] 0.0, 128
        %960 = vxpose.xlu0.b32.cont [8/16] 0.0, 128
        %961 = vxpose.xlu0.b32.cont [9/16] 0.0, 128
        %962 = vxpose.xlu0.b32.cont [10/16] 0.0, 128
        %963 = vxpose.xlu0.b32.cont [11/16] 0.0, 128
        %964 = vxpose.xlu0.b32.cont [12/16] 0.0, 128
        %965 = vxpose.xlu0.b32.cont [13/16] 0.0, 128
        %966 = vxpose.xlu0.b32.cont [14/16] 0.0, 128
        %967 = vxpose.xlu0.b32.cont [15/16] 0.0, 128
        %968 = vxpose.xlu0.b32.end [16/16] 0.0, 128
        %v969 = vpop.trf.xlu0
        %v970 = vpop.trf.xlu0
        %v971 = vpop.trf.xlu0
        %v972 = vpop.trf.xlu0
        %v973 = vpop.trf.xlu0
        %v974 = vpop.trf.xlu0
        %v975 = vpop.trf.xlu0
        %v976 = vpop.trf.xlu0
        %v977 = vpop.trf.xlu0
        %v978 = vpop.trf.xlu0
        %v979 = vpop.trf.xlu0
        %v980 = vpop.trf.xlu0
        %v981 = vpop.trf.xlu0
        %v982 = vpop.trf.xlu0
        %v983 = vpop.trf.xlu0
        %v984 = vpop.trf.xlu0
        %985 = vxpose.xlu0.b32.start [1/16] %v753, 128
        %986 = vxpose.xlu0.b32.cont [2/16] %v758, 128
        %987 = vxpose.xlu0.b32.cont [3/16] 0.0, 128
        %988 = vxpose.xlu0.b32.cont [4/16] 0.0, 128
        %989 = vxpose.xlu0.b32.cont [5/16] 0.0, 128
        %990 = vxpose.xlu0.b32.cont [6/16] 0.0, 128
        %991 = vxpose.xlu0.b32.cont [7/16] 0.0, 128
        %992 = vxpose.xlu0.b32.cont [8/16] 0.0, 128
        %993 = vxpose.xlu0.b32.cont [9/16] 0.0, 128
        %994 = vxpose.xlu0.b32.cont [10/16] 0.0, 128
        %995 = vxpose.xlu0.b32.cont [11/16] 0.0, 128
        %996 = vxpose.xlu0.b32.cont [12/16] 0.0, 128
        %997 = vxpose.xlu0.b32.cont [13/16] 0.0, 128
        %998 = vxpose.xlu0.b32.cont [14/16] 0.0, 128
        %999 = vxpose.xlu0.b32.cont [15/16] 0.0, 128
        %1000 = vxpose.xlu0.b32.end [16/16] 0.0, 128
        %v1001 = vpop.trf.xlu0
        %v1002 = vpop.trf.xlu0
        %v1003 = vpop.trf.xlu0
        %v1004 = vpop.trf.xlu0
        %v1005 = vpop.trf.xlu0
        %v1006 = vpop.trf.xlu0
        %v1007 = vpop.trf.xlu0
        %v1008 = vpop.trf.xlu0
        %v1009 = vpop.trf.xlu0
        %v1010 = vpop.trf.xlu0
        %v1011 = vpop.trf.xlu0
        %v1012 = vpop.trf.xlu0
        %v1013 = vpop.trf.xlu0
        %v1014 = vpop.trf.xlu0
        %v1015 = vpop.trf.xlu0
        %v1016 = vpop.trf.xlu0
        %vm1017 = vcmask 130048
        %v1018 = vsel %vm1017, %v777, -inf
        %1019 = vmax.xlane.f32.xlu0 %v1018
        %v1020 = vpop.xlane.xlu0 %1019
        %v1021 = vsel %vm1017, %v809, -inf
        %1022 = vmax.xlane.f32.xlu0 %v1021
        %v1023 = vpop.xlane.xlu0 %1022
        %v1024 = vsel %vm1017, %v841, -inf
        %1025 = vmax.xlane.f32.xlu0 %v1024
        %v1026 = vpop.xlane.xlu0 %1025
        %v1027 = vsel %vm1017, %v873, -inf
        %1028 = vmax.xlane.f32.xlu0 %v1027
        %v1029 = vpop.xlane.xlu0 %1028
        %v1030 = vsel %vm1017, %v905, -inf
        %1031 = vmax.xlane.f32.xlu0 %v1030
        %v1032 = vpop.xlane.xlu0 %1031
        %v1033 = vsel %vm1017, %v937, -inf
        %1034 = vmax.xlane.f32.xlu0 %v1033
        %v1035 = vpop.xlane.xlu0 %1034
        %v1036 = vsel %vm1017, %v969, -inf
        %1037 = vmax.xlane.f32.xlu0 %v1036
        %v1038 = vpop.xlane.xlu0 %1037
        %v1039 = vsel %vm1017, %v1001, -inf
        %1040 = vmax.xlane.f32.xlu0 %v1039
        %v1041 = vpop.xlane.xlu0 %1040
        %v1042 = vsub.f32 %v777, %v1020
        %v1043 = vsub.f32 %v809, %v1023
        %v1044 = vsub.f32 %v841, %v1026
        %v1045 = vsub.f32 %v873, %v1029
        %v1046 = vsub.f32 %v905, %v1032
        %v1047 = vsub.f32 %v937, %v1035
        %v1048 = vsub.f32 %v969, %v1038
        %v1049 = vsub.f32 %v1001, %v1041
        %v1050 = vmul.f32 %v1042, 1.442695
        %v1051 = vpow.pop %v1050
        %v1052 = vmul.f32 %v1043, 1.442695
        %v1053 = vpow.pop %v1052
        %v1054 = vmul.f32 %v1044, 1.442695
        %v1055 = vpow.pop %v1054
        %v1056 = vmul.f32 %v1045, 1.442695
        %v1057 = vpow.pop %v1056
        %v1058 = vmul.f32 %v1046, 1.442695
        %v1059 = vpow.pop %v1058
        %v1060 = vmul.f32 %v1047, 1.442695
        %v1061 = vpow.pop %v1060
        %v1062 = vmul.f32 %v1048, 1.442695
        %v1063 = vpow.pop %v1062
        %v1064 = vmul.f32 %v1049, 1.442695
        %v1065 = vpow.pop %v1064
        %v1066 = vsel %vm1017, %v1051, 0.0
        %1067 = vadd.xlane.f32.xlu0 %v1066
        %v1068 = vpop.xlane.xlu0 %1067
        %v1069 = vsel %vm1017, %v1053, 0.0
        %1070 = vadd.xlane.f32.xlu0 %v1069
        %v1071 = vpop.xlane.xlu0 %1070
        %v1072 = vsel %vm1017, %v1055, 0.0
        %1073 = vadd.xlane.f32.xlu0 %v1072
        %v1074 = vpop.xlane.xlu0 %1073
        %v1075 = vsel %vm1017, %v1057, 0.0
        %1076 = vadd.xlane.f32.xlu0 %v1075
        %v1077 = vpop.xlane.xlu0 %1076
        %v1078 = vsel %vm1017, %v1059, 0.0
        %1079 = vadd.xlane.f32.xlu0 %v1078
        %v1080 = vpop.xlane.xlu0 %1079
        %v1081 = vsel %vm1017, %v1061, 0.0
        %1082 = vadd.xlane.f32.xlu0 %v1081
        %v1083 = vpop.xlane.xlu0 %1082
        %v1084 = vsel %vm1017, %v1063, 0.0
        %1085 = vadd.xlane.f32.xlu0 %v1084
        %v1086 = vpop.xlane.xlu0 %1085
        %v1087 = vsel %vm1017, %v1065, 0.0
        %1088 = vadd.xlane.f32.xlu0 %v1087
        %v1089 = vpop.xlane.xlu0 %1088
        %v1090 = vrcp.pop %v1068
        %v1091 = vmul.f32 %v1051, %v1090
        %v1092 = vrcp.pop %v1071
        %v1093 = vmul.f32 %v1053, %v1092
        %v1094 = vrcp.pop %v1074
        %v1095 = vmul.f32 %v1055, %v1094
        %v1096 = vrcp.pop %v1077
        %v1097 = vmul.f32 %v1057, %v1096
        %v1098 = vrcp.pop %v1080
        %v1099 = vmul.f32 %v1059, %v1098
        %v1100 = vrcp.pop %v1083
        %v1101 = vmul.f32 %v1061, %v1100
        %v1102 = vrcp.pop %v1086
        %v1103 = vmul.f32 %v1063, %v1102
        %v1104 = vrcp.pop %v1089
        %v1105 = vmul.f32 %v1065, %v1104
        %v1107 = vsel %vm1017, %v1091, 0
        %1109 = vmatprep.subr.mxu0 0.0
        %1110 = vmatpush1.msra.mxu0 %v522
        %1111 = vmatprep.subr.mxu0 0.0
        %1112 = vmatpush1.msra.mxu0 %v527
        %1113 = vmatprep.subr.mxu0 0.0
        %1114 = vmatpush1.msra.mxu0 0.0
        %1115 = vmatprep.subr.mxu0 0.0
        %1116 = vmatpush1.msra.mxu0 0.0
        %1117 = vmatprep.subr.mxu0 0.0
        %1118 = vmatpush1.msra.mxu0 0.0
        %1119 = vmatprep.subr.mxu0 0.0
        %1120 = vmatpush1.msra.mxu0 0.0
        %1121 = vmatprep.subr.mxu0 0.0
        %1122 = vmatpush1.msra.mxu0 0.0
        %1123 = vmatprep.subr.mxu0 0.0
        %1124 = vmatpush1.msra.mxu0 0.0
        %1125 = vmatprep.subr.mxu0 0.0
        %1126 = vmatpush1.msra.mxu0 0.0
        %1127 = vmatprep.subr.mxu0 0.0
        %1128 = vmatpush1.msra.mxu0 0.0
        %1129 = vmatprep.subr.mxu0 0.0
        %1130 = vmatpush1.msra.mxu0 0.0
        %1131 = vmatprep.subr.mxu0 0.0
        %1132 = vmatpush1.msra.mxu0 0.0
        %1133 = vmatprep.subr.mxu0 0.0
        %1134 = vmatpush1.msra.mxu0 0.0
        %1135 = vmatprep.subr.mxu0 0.0
        %1136 = vmatpush1.msra.mxu0 0.0
        %1137 = vmatprep.subr.mxu0 0.0
        %1138 = vmatpush1.msra.mxu0 0.0
        %1139 = vmatprep.subr.mxu0 0.0
        %1140 = vmatpush1.msra.mxu0 0.0
        %1141 = vmatprep.subr.mxu0 0.0
        %1142 = vmatpush1.msra.mxu0 0.0
        %1143 = vmatprep.subr.mxu0 0.0
        %1144 = vmatpush1.msra.mxu0 0.0
        %1145 = vmatprep.subr.mxu0 0.0
        %1146 = vmatpush1.msra.mxu0 0.0
        %1147 = vmatprep.subr.mxu0 0.0
        %1148 = vmatpush1.msra.mxu0 0.0
        %1149 = vmatprep.subr.mxu0 0.0
        %1150 = vmatpush1.msra.mxu0 0.0
        %1151 = vmatprep.subr.mxu0 0.0
        %1152 = vmatpush1.msra.mxu0 0.0
        %1153 = vmatprep.subr.mxu0 0.0
        %1154 = vmatpush1.msra.mxu0 0.0
        %1155 = vmatprep.subr.mxu0 0.0
        %1156 = vmatpush1.msra.mxu0 0.0
        %1157 = vmatprep.subr.mxu0 0.0
        %1158 = vmatpush1.msra.mxu0 0.0
        %1159 = vmatprep.subr.mxu0 0.0
        %1160 = vmatpush1.msra.mxu0 0.0
        %1161 = vmatprep.subr.mxu0 0.0
        %1162 = vmatpush1.msra.mxu0 0.0
        %1163 = vmatprep.subr.mxu0 0.0
        %1164 = vmatpush1.msra.mxu0 0.0
        %1165 = vmatprep.subr.mxu0 0.0
        %1166 = vmatpush1.msra.mxu0 0.0
        %1167 = vmatprep.subr.mxu0 0.0
        %1168 = vmatpush1.msra.mxu0 0.0
        %1169 = vmatprep.subr.mxu0 0.0
        %1170 = vmatpush1.msra.mxu0 0.0
        %1171 = vmatprep.subr.mxu0 0.0
        %1172 = vmatpush1.msra.mxu0 0.0
        %1173 = vmatprep.mubr.f32.mxu0 0.0
        %1174 = vmatmul.mubr.f32.gmra.mrb[0].mxu0 %v1107
        %v1175 = vpop.f32.mrb[0].mxu0
        %v1176 = vadd.f32 0.0, %v1175
        %v1177 = vpop.f32.mrb[0].mxu0
        %1178 = vdwg.mxu0
        %v1180 = vsel %vm1017, %v1093, 0
        %1182 = vmatprep.subr.mxu0 0.0
        %1183 = vmatpush1.msra.mxu0 %v532
        %1184 = vmatprep.subr.mxu0 0.0
        %1185 = vmatpush1.msra.mxu0 %v537
        %1186 = vmatprep.subr.mxu0 0.0
        %1187 = vmatpush1.msra.mxu0 0.0
        %1188 = vmatprep.subr.mxu0 0.0
        %1189 = vmatpush1.msra.mxu0 0.0
        %1190 = vmatprep.subr.mxu0 0.0
        %1191 = vmatpush1.msra.mxu0 0.0
        %1192 = vmatprep.subr.mxu0 0.0
        %1193 = vmatpush1.msra.mxu0 0.0
        %1194 = vmatprep.subr.mxu0 0.0
        %1195 = vmatpush1.msra.mxu0 0.0
        %1196 = vmatprep.subr.mxu0 0.0
        %1197 = vmatpush1.msra.mxu0 0.0
        %1198 = vmatprep.subr.mxu0 0.0
        %1199 = vmatpush1.msra.mxu0 0.0
        %1200 = vmatprep.subr.mxu0 0.0
        %1201 = vmatpush1.msra.mxu0 0.0
        %1202 = vmatprep.subr.mxu0 0.0
        %1203 = vmatpush1.msra.mxu0 0.0
        %1204 = vmatprep.subr.mxu0 0.0
        %1205 = vmatpush1.msra.mxu0 0.0
        %1206 = vmatprep.subr.mxu0 0.0
        %1207 = vmatpush1.msra.mxu0 0.0
        %1208 = vmatprep.subr.mxu0 0.0
        %1209 = vmatpush1.msra.mxu0 0.0
        %1210 = vmatprep.subr.mxu0 0.0
        %1211 = vmatpush1.msra.mxu0 0.0
        %1212 = vmatprep.subr.mxu0 0.0
        %1213 = vmatpush1.msra.mxu0 0.0
        %1214 = vmatprep.subr.mxu0 0.0
        %1215 = vmatpush1.msra.mxu0 0.0
        %1216 = vmatprep.subr.mxu0 0.0
        %1217 = vmatpush1.msra.mxu0 0.0
        %1218 = vmatprep.subr.mxu0 0.0
        %1219 = vmatpush1.msra.mxu0 0.0
        %1220 = vmatprep.subr.mxu0 0.0
        %1221 = vmatpush1.msra.mxu0 0.0
        %1222 = vmatprep.subr.mxu0 0.0
        %1223 = vmatpush1.msra.mxu0 0.0
        %1224 = vmatprep.subr.mxu0 0.0
        %1225 = vmatpush1.msra.mxu0 0.0
        %1226 = vmatprep.subr.mxu0 0.0
        %1227 = vmatpush1.msra.mxu0 0.0
        %1228 = vmatprep.subr.mxu0 0.0
        %1229 = vmatpush1.msra.mxu0 0.0
        %1230 = vmatprep.subr.mxu0 0.0
        %1231 = vmatpush1.msra.mxu0 0.0
        %1232 = vmatprep.subr.mxu0 0.0
        %1233 = vmatpush1.msra.mxu0 0.0
        %1234 = vmatprep.subr.mxu0 0.0
        %1235 = vmatpush1.msra.mxu0 0.0
        %1236 = vmatprep.subr.mxu0 0.0
        %1237 = vmatpush1.msra.mxu0 0.0
        %1238 = vmatprep.subr.mxu0 0.0
        %1239 = vmatpush1.msra.mxu0 0.0
        %1240 = vmatprep.subr.mxu0 0.0
        %1241 = vmatpush1.msra.mxu0 0.0
        %1242 = vmatprep.subr.mxu0 0.0
        %1243 = vmatpush1.msra.mxu0 0.0
        %1244 = vmatprep.subr.mxu0 0.0
        %1245 = vmatpush1.msra.mxu0 0.0
        %1246 = vmatprep.mubr.f32.mxu0 0.0
        %1247 = vmatmul.mubr.f32.gmra.mrb[0].mxu0 %v1180
        %v1248 = vpop.f32.mrb[0].mxu0
        %v1249 = vadd.f32 0.0, %v1248
        %v1250 = vpop.f32.mrb[0].mxu0
        %1251 = vdwg.mxu0
        %v1253 = vsel %vm1017, %v1095, 0
        %1255 = vmatprep.subr.mxu0 0.0
        %1256 = vmatpush1.msra.mxu0 %v542
        %1257 = vmatprep.subr.mxu0 0.0
        %1258 = vmatpush1.msra.mxu0 %v547
        %1259 = vmatprep.subr.mxu0 0.0
        %1260 = vmatpush1.msra.mxu0 0.0
        %1261 = vmatprep.subr.mxu0 0.0
        %1262 = vmatpush1.msra.mxu0 0.0
        %1263 = vmatprep.subr.mxu0 0.0
        %1264 = vmatpush1.msra.mxu0 0.0
        %1265 = vmatprep.subr.mxu0 0.0
        %1266 = vmatpush1.msra.mxu0 0.0
        %1267 = vmatprep.subr.mxu0 0.0
        %1268 = vmatpush1.msra.mxu0 0.0
        %1269 = vmatprep.subr.mxu0 0.0
        %1270 = vmatpush1.msra.mxu0 0.0
        %1271 = vmatprep.subr.mxu0 0.0
        %1272 = vmatpush1.msra.mxu0 0.0
        %1273 = vmatprep.subr.mxu0 0.0
        %1274 = vmatpush1.msra.mxu0 0.0
        %1275 = vmatprep.subr.mxu0 0.0
        %1276 = vmatpush1.msra.mxu0 0.0
        %1277 = vmatprep.subr.mxu0 0.0
        %1278 = vmatpush1.msra.mxu0 0.0
        %1279 = vmatprep.subr.mxu0 0.0
        %1280 = vmatpush1.msra.mxu0 0.0
        %1281 = vmatprep.subr.mxu0 0.0
        %1282 = vmatpush1.msra.mxu0 0.0
        %1283 = vmatprep.subr.mxu0 0.0
        %1284 = vmatpush1.msra.mxu0 0.0
        %1285 = vmatprep.subr.mxu0 0.0
        %1286 = vmatpush1.msra.mxu0 0.0
        %1287 = vmatprep.subr.mxu0 0.0
        %1288 = vmatpush1.msra.mxu0 0.0
        %1289 = vmatprep.subr.mxu0 0.0
        %1290 = vmatpush1.msra.mxu0 0.0
        %1291 = vmatprep.subr.mxu0 0.0
        %1292 = vmatpush1.msra.mxu0 0.0
        %1293 = vmatprep.subr.mxu0 0.0
        %1294 = vmatpush1.msra.mxu0 0.0
        %1295 = vmatprep.subr.mxu0 0.0
        %1296 = vmatpush1.msra.mxu0 0.0
        %1297 = vmatprep.subr.mxu0 0.0
        %1298 = vmatpush1.msra.mxu0 0.0
        %1299 = vmatprep.subr.mxu0 0.0
        %1300 = vmatpush1.msra.mxu0 0.0
        %1301 = vmatprep.subr.mxu0 0.0
        %1302 = vmatpush1.msra.mxu0 0.0
        %1303 = vmatprep.subr.mxu0 0.0
        %1304 = vmatpush1.msra.mxu0 0.0
        %1305 = vmatprep.subr.mxu0 0.0
        %1306 = vmatpush1.msra.mxu0 0.0
        %1307 = vmatprep.subr.mxu0 0.0
        %1308 = vmatpush1.msra.mxu0 0.0
        %1309 = vmatprep.subr.mxu0 0.0
        %1310 = vmatpush1.msra.mxu0 0.0
        %1311 = vmatprep.subr.mxu0 0.0
        %1312 = vmatpush1.msra.mxu0 0.0
        %1313 = vmatprep.subr.mxu0 0.0
        %1314 = vmatpush1.msra.mxu0 0.0
        %1315 = vmatprep.subr.mxu0 0.0
        %1316 = vmatpush1.msra.mxu0 0.0
        %1317 = vmatprep.subr.mxu0 0.0
        %1318 = vmatpush1.msra.mxu0 0.0
        %1319 = vmatprep.mubr.f32.mxu0 0.0
        %1320 = vmatmul.mubr.f32.gmra.mrb[0].mxu0 %v1253
        %v1321 = vpop.f32.mrb[0].mxu0
        %v1322 = vadd.f32 0.0, %v1321
        %v1323 = vpop.f32.mrb[0].mxu0
        %1324 = vdwg.mxu0
        %v1326 = vsel %vm1017, %v1097, 0
        %1328 = vmatprep.subr.mxu0 0.0
        %1329 = vmatpush1.msra.mxu0 %v552
        %1330 = vmatprep.subr.mxu0 0.0
        %1331 = vmatpush1.msra.mxu0 %v557
        %1332 = vmatprep.subr.mxu0 0.0
        %1333 = vmatpush1.msra.mxu0 0.0
        %1334 = vmatprep.subr.mxu0 0.0
        %1335 = vmatpush1.msra.mxu0 0.0
        %1336 = vmatprep.subr.mxu0 0.0
        %1337 = vmatpush1.msra.mxu0 0.0
        %1338 = vmatprep.subr.mxu0 0.0
        %1339 = vmatpush1.msra.mxu0 0.0
        %1340 = vmatprep.subr.mxu0 0.0
        %1341 = vmatpush1.msra.mxu0 0.0
        %1342 = vmatprep.subr.mxu0 0.0
        %1343 = vmatpush1.msra.mxu0 0.0
        %1344 = vmatprep.subr.mxu0 0.0
        %1345 = vmatpush1.msra.mxu0 0.0
        %1346 = vmatprep.subr.mxu0 0.0
        %1347 = vmatpush1.msra.mxu0 0.0
        %1348 = vmatprep.subr.mxu0 0.0
        %1349 = vmatpush1.msra.mxu0 0.0
        %1350 = vmatprep.subr.mxu0 0.0
        %1351 = vmatpush1.msra.mxu0 0.0
        %1352 = vmatprep.subr.mxu0 0.0
        %1353 = vmatpush1.msra.mxu0 0.0
        %1354 = vmatprep.subr.mxu0 0.0
        %1355 = vmatpush1.msra.mxu0 0.0
        %1356 = vmatprep.subr.mxu0 0.0
        %1357 = vmatpush1.msra.mxu0 0.0
        %1358 = vmatprep.subr.mxu0 0.0
        %1359 = vmatpush1.msra.mxu0 0.0
        %1360 = vmatprep.subr.mxu0 0.0
        %1361 = vmatpush1.msra.mxu0 0.0
        %1362 = vmatprep.subr.mxu0 0.0
        %1363 = vmatpush1.msra.mxu0 0.0
        %1364 = vmatprep.subr.mxu0 0.0
        %1365 = vmatpush1.msra.mxu0 0.0
        %1366 = vmatprep.subr.mxu0 0.0
        %1367 = vmatpush1.msra.mxu0 0.0
        %1368 = vmatprep.subr.mxu0 0.0
        %1369 = vmatpush1.msra.mxu0 0.0
        %1370 = vmatprep.subr.mxu0 0.0
        %1371 = vmatpush1.msra.mxu0 0.0
        %1372 = vmatprep.subr.mxu0 0.0
        %1373 = vmatpush1.msra.mxu0 0.0
        %1374 = vmatprep.subr.mxu0 0.0
        %1375 = vmatpush1.msra.mxu0 0.0
        %1376 = vmatprep.subr.mxu0 0.0
        %1377 = vmatpush1.msra.mxu0 0.0
        %1378 = vmatprep.subr.mxu0 0.0
        %1379 = vmatpush1.msra.mxu0 0.0
        %1380 = vmatprep.subr.mxu0 0.0
        %1381 = vmatpush1.msra.mxu0 0.0
        %1382 = vmatprep.subr.mxu0 0.0
        %1383 = vmatpush1.msra.mxu0 0.0
        %1384 = vmatprep.subr.mxu0 0.0
        %1385 = vmatpush1.msra.mxu0 0.0
        %1386 = vmatprep.subr.mxu0 0.0
        %1387 = vmatpush1.msra.mxu0 0.0
        %1388 = vmatprep.subr.mxu0 0.0
        %1389 = vmatpush1.msra.mxu0 0.0
        %1390 = vmatprep.subr.mxu0 0.0
        %1391 = vmatpush1.msra.mxu0 0.0
        %1392 = vmatprep.mubr.f32.mxu0 0.0
        %1393 = vmatmul.mubr.f32.gmra.mrb[0].mxu0 %v1326
        %v1394 = vpop.f32.mrb[0].mxu0
        %v1395 = vadd.f32 0.0, %v1394
        %v1396 = vpop.f32.mrb[0].mxu0
        %1397 = vdwg.mxu0
        %v1399 = vsel %vm1017, %v1099, 0
        %1401 = vmatprep.subr.mxu0 0.0
        %1402 = vmatpush1.msra.mxu0 %v562
        %1403 = vmatprep.subr.mxu0 0.0
        %1404 = vmatpush1.msra.mxu0 %v567
        %1405 = vmatprep.subr.mxu0 0.0
        %1406 = vmatpush1.msra.mxu0 0.0
        %1407 = vmatprep.subr.mxu0 0.0
        %1408 = vmatpush1.msra.mxu0 0.0
        %1409 = vmatprep.subr.mxu0 0.0
        %1410 = vmatpush1.msra.mxu0 0.0
        %1411 = vmatprep.subr.mxu0 0.0
        %1412 = vmatpush1.msra.mxu0 0.0
        %1413 = vmatprep.subr.mxu0 0.0
        %1414 = vmatpush1.msra.mxu0 0.0
        %1415 = vmatprep.subr.mxu0 0.0
        %1416 = vmatpush1.msra.mxu0 0.0
        %1417 = vmatprep.subr.mxu0 0.0
        %1418 = vmatpush1.msra.mxu0 0.0
        %1419 = vmatprep.subr.mxu0 0.0
        %1420 = vmatpush1.msra.mxu0 0.0
        %1421 = vmatprep.subr.mxu0 0.0
        %1422 = vmatpush1.msra.mxu0 0.0
        %1423 = vmatprep.subr.mxu0 0.0
        %1424 = vmatpush1.msra.mxu0 0.0
        %1425 = vmatprep.subr.mxu0 0.0
        %1426 = vmatpush1.msra.mxu0 0.0
        %1427 = vmatprep.subr.mxu0 0.0
        %1428 = vmatpush1.msra.mxu0 0.0
        %1429 = vmatprep.subr.mxu0 0.0
        %1430 = vmatpush1.msra.mxu0 0.0
        %1431 = vmatprep.subr.mxu0 0.0
        %1432 = vmatpush1.msra.mxu0 0.0
        %1433 = vmatprep.subr.mxu0 0.0
        %1434 = vmatpush1.msra.mxu0 0.0
        %1435 = vmatprep.subr.mxu0 0.0
        %1436 = vmatpush1.msra.mxu0 0.0
        %1437 = vmatprep.subr.mxu0 0.0
        %1438 = vmatpush1.msra.mxu0 0.0
        %1439 = vmatprep.subr.mxu0 0.0
        %1440 = vmatpush1.msra.mxu0 0.0
        %1441 = vmatprep.subr.mxu0 0.0
        %1442 = vmatpush1.msra.mxu0 0.0
        %1443 = vmatprep.subr.mxu0 0.0
        %1444 = vmatpush1.msra.mxu0 0.0
        %1445 = vmatprep.subr.mxu0 0.0
        %1446 = vmatpush1.msra.mxu0 0.0
        %1447 = vmatprep.subr.mxu0 0.0
        %1448 = vmatpush1.msra.mxu0 0.0
        %1449 = vmatprep.subr.mxu0 0.0
        %1450 = vmatpush1.msra.mxu0 0.0
        %1451 = vmatprep.subr.mxu0 0.0
        %1452 = vmatpush1.msra.mxu0 0.0
        %1453 = vmatprep.subr.mxu0 0.0
        %1454 = vmatpush1.msra.mxu0 0.0
        %1455 = vmatprep.subr.mxu0 0.0
        %1456 = vmatpush1.msra.mxu0 0.0
        %1457 = vmatprep.subr.mxu0 0.0
        %1458 = vmatpush1.msra.mxu0 0.0
        %1459 = vmatprep.subr.mxu0 0.0
        %1460 = vmatpush1.msra.mxu0 0.0
        %1461 = vmatprep.subr.mxu0 0.0
        %1462 = vmatpush1.msra.mxu0 0.0
        %1463 = vmatprep.subr.mxu0 0.0
        %1464 = vmatpush1.msra.mxu0 0.0
        %1465 = vmatprep.mubr.f32.mxu0 0.0
        %1466 = vmatmul.mubr.f32.gmra.mrb[0].mxu0 %v1399
        %v1467 = vpop.f32.mrb[0].mxu0
        %v1468 = vadd.f32 0.0, %v1467
        %v1469 = vpop.f32.mrb[0].mxu0
        %1470 = vdwg.mxu0
        %v1472 = vsel %vm1017, %v1101, 0
        %1474 = vmatprep.subr.mxu0 0.0
        %1475 = vmatpush1.msra.mxu0 %v572
        %1476 = vmatprep.subr.mxu0 0.0
        %1477 = vmatpush1.msra.mxu0 %v577
        %1478 = vmatprep.subr.mxu0 0.0
        %1479 = vmatpush1.msra.mxu0 0.0
        %1480 = vmatprep.subr.mxu0 0.0
        %1481 = vmatpush1.msra.mxu0 0.0
        %1482 = vmatprep.subr.mxu0 0.0
        %1483 = vmatpush1.msra.mxu0 0.0
        %1484 = vmatprep.subr.mxu0 0.0
        %1485 = vmatpush1.msra.mxu0 0.0
        %1486 = vmatprep.subr.mxu0 0.0
        %1487 = vmatpush1.msra.mxu0 0.0
        %1488 = vmatprep.subr.mxu0 0.0
        %1489 = vmatpush1.msra.mxu0 0.0
        %1490 = vmatprep.subr.mxu0 0.0
        %1491 = vmatpush1.msra.mxu0 0.0
        %1492 = vmatprep.subr.mxu0 0.0
        %1493 = vmatpush1.msra.mxu0 0.0
        %1494 = vmatprep.subr.mxu0 0.0
        %1495 = vmatpush1.msra.mxu0 0.0
        %1496 = vmatprep.subr.mxu0 0.0
        %1497 = vmatpush1.msra.mxu0 0.0
        %1498 = vmatprep.subr.mxu0 0.0
        %1499 = vmatpush1.msra.mxu0 0.0
        %1500 = vmatprep.subr.mxu0 0.0
        %1501 = vmatpush1.msra.mxu0 0.0
        %1502 = vmatprep.subr.mxu0 0.0
        %1503 = vmatpush1.msra.mxu0 0.0
        %1504 = vmatprep.subr.mxu0 0.0
        %1505 = vmatpush1.msra.mxu0 0.0
        %1506 = vmatprep.subr.mxu0 0.0
        %1507 = vmatpush1.msra.mxu0 0.0
        %1508 = vmatprep.subr.mxu0 0.0
        %1509 = vmatpush1.msra.mxu0 0.0
        %1510 = vmatprep.subr.mxu0 0.0
        %1511 = vmatpush1.msra.mxu0 0.0
        %1512 = vmatprep.subr.mxu0 0.0
        %1513 = vmatpush1.msra.mxu0 0.0
        %1514 = vmatprep.subr.mxu0 0.0
        %1515 = vmatpush1.msra.mxu0 0.0
        %1516 = vmatprep.subr.mxu0 0.0
        %1517 = vmatpush1.msra.mxu0 0.0
        %1518 = vmatprep.subr.mxu0 0.0
        %1519 = vmatpush1.msra.mxu0 0.0
        %1520 = vmatprep.subr.mxu0 0.0
        %1521 = vmatpush1.msra.mxu0 0.0
        %1522 = vmatprep.subr.mxu0 0.0
        %1523 = vmatpush1.msra.mxu0 0.0
        %1524 = vmatprep.subr.mxu0 0.0
        %1525 = vmatpush1.msra.mxu0 0.0
        %1526 = vmatprep.subr.mxu0 0.0
        %1527 = vmatpush1.msra.mxu0 0.0
        %1528 = vmatprep.subr.mxu0 0.0
        %1529 = vmatpush1.msra.mxu0 0.0
        %1530 = vmatprep.subr.mxu0 0.0
        %1531 = vmatpush1.msra.mxu0 0.0
        %1532 = vmatprep.subr.mxu0 0.0
        %1533 = vmatpush1.msra.mxu0 0.0
        %1534 = vmatprep.subr.mxu0 0.0
        %1535 = vmatpush1.msra.mxu0 0.0
        %1536 = vmatprep.subr.mxu0 0.0
        %1537 = vmatpush1.msra.mxu0 0.0
        %1538 = vmatprep.mubr.f32.mxu0 0.0
        %1539 = vmatmul.mubr.f32.gmra.mrb[0].mxu0 %v1472
        %v1540 = vpop.f32.mrb[0].mxu0
        %v1541 = vadd.f32 0.0, %v1540
        %v1542 = vpop.f32.mrb[0].mxu0
        %1543 = vdwg.mxu0
        %v1545 = vsel %vm1017, %v1103, 0
        %1547 = vmatprep.subr.mxu0 0.0
        %1548 = vmatpush1.msra.mxu0 %v582
        %1549 = vmatprep.subr.mxu0 0.0
        %1550 = vmatpush1.msra.mxu0 %v587
        %1551 = vmatprep.subr.mxu0 0.0
        %1552 = vmatpush1.msra.mxu0 0.0
        %1553 = vmatprep.subr.mxu0 0.0
        %1554 = vmatpush1.msra.mxu0 0.0
        %1555 = vmatprep.subr.mxu0 0.0
        %1556 = vmatpush1.msra.mxu0 0.0
        %1557 = vmatprep.subr.mxu0 0.0
        %1558 = vmatpush1.msra.mxu0 0.0
        %1559 = vmatprep.subr.mxu0 0.0
        %1560 = vmatpush1.msra.mxu0 0.0
        %1561 = vmatprep.subr.mxu0 0.0
        %1562 = vmatpush1.msra.mxu0 0.0
        %1563 = vmatprep.subr.mxu0 0.0
        %1564 = vmatpush1.msra.mxu0 0.0
        %1565 = vmatprep.subr.mxu0 0.0
        %1566 = vmatpush1.msra.mxu0 0.0
        %1567 = vmatprep.subr.mxu0 0.0
        %1568 = vmatpush1.msra.mxu0 0.0
        %1569 = vmatprep.subr.mxu0 0.0
        %1570 = vmatpush1.msra.mxu0 0.0
        %1571 = vmatprep.subr.mxu0 0.0
        %1572 = vmatpush1.msra.mxu0 0.0
        %1573 = vmatprep.subr.mxu0 0.0
        %1574 = vmatpush1.msra.mxu0 0.0
        %1575 = vmatprep.subr.mxu0 0.0
        %1576 = vmatpush1.msra.mxu0 0.0
        %1577 = vmatprep.subr.mxu0 0.0
        %1578 = vmatpush1.msra.mxu0 0.0
        %1579 = vmatprep.subr.mxu0 0.0
        %1580 = vmatpush1.msra.mxu0 0.0
        %1581 = vmatprep.subr.mxu0 0.0
        %1582 = vmatpush1.msra.mxu0 0.0
        %1583 = vmatprep.subr.mxu0 0.0
        %1584 = vmatpush1.msra.mxu0 0.0
        %1585 = vmatprep.subr.mxu0 0.0
        %1586 = vmatpush1.msra.mxu0 0.0
        %1587 = vmatprep.subr.mxu0 0.0
        %1588 = vmatpush1.msra.mxu0 0.0
        %1589 = vmatprep.subr.mxu0 0.0
        %1590 = vmatpush1.msra.mxu0 0.0
        %1591 = vmatprep.subr.mxu0 0.0
        %1592 = vmatpush1.msra.mxu0 0.0
        %1593 = vmatprep.subr.mxu0 0.0
        %1594 = vmatpush1.msra.mxu0 0.0
        %1595 = vmatprep.subr.mxu0 0.0
        %1596 = vmatpush1.msra.mxu0 0.0
        %1597 = vmatprep.subr.mxu0 0.0
        %1598 = vmatpush1.msra.mxu0 0.0
        %1599 = vmatprep.subr.mxu0 0.0
        %1600 = vmatpush1.msra.mxu0 0.0
        %1601 = vmatprep.subr.mxu0 0.0
        %1602 = vmatpush1.msra.mxu0 0.0
        %1603 = vmatprep.subr.mxu0 0.0
        %1604 = vmatpush1.msra.mxu0 0.0
        %1605 = vmatprep.subr.mxu0 0.0
        %1606 = vmatpush1.msra.mxu0 0.0
        %1607 = vmatprep.subr.mxu0 0.0
        %1608 = vmatpush1.msra.mxu0 0.0
        %1609 = vmatprep.subr.mxu0 0.0
        %1610 = vmatpush1.msra.mxu0 0.0
        %1611 = vmatprep.mubr.f32.mxu0 0.0
        %1612 = vmatmul.mubr.f32.gmra.mrb[0].mxu0 %v1545
        %v1613 = vpop.f32.mrb[0].mxu0
        %v1614 = vadd.f32 0.0, %v1613
        %v1615 = vpop.f32.mrb[0].mxu0
        %1616 = vdwg.mxu0
        %v1618 = vsel %vm1017, %v1105, 0
        %1620 = vmatprep.subr.mxu0 0.0
        %1621 = vmatpush1.msra.mxu0 %v592
        %1622 = vmatprep.subr.mxu0 0.0
        %1623 = vmatpush1.msra.mxu0 %v597
        %1624 = vmatprep.subr.mxu0 0.0
        %1625 = vmatpush1.msra.mxu0 0.0
        %1626 = vmatprep.subr.mxu0 0.0
        %1627 = vmatpush1.msra.mxu0 0.0
        %1628 = vmatprep.subr.mxu0 0.0
        %1629 = vmatpush1.msra.mxu0 0.0
        %1630 = vmatprep.subr.mxu0 0.0
        %1631 = vmatpush1.msra.mxu0 0.0
        %1632 = vmatprep.subr.mxu0 0.0
        %1633 = vmatpush1.msra.mxu0 0.0
        %1634 = vmatprep.subr.mxu0 0.0
        %1635 = vmatpush1.msra.mxu0 0.0
        %1636 = vmatprep.subr.mxu0 0.0
        %1637 = vmatpush1.msra.mxu0 0.0
        %1638 = vmatprep.subr.mxu0 0.0
        %1639 = vmatpush1.msra.mxu0 0.0
        %1640 = vmatprep.subr.mxu0 0.0
        %1641 = vmatpush1.msra.mxu0 0.0
        %1642 = vmatprep.subr.mxu0 0.0
        %1643 = vmatpush1.msra.mxu0 0.0
        %1644 = vmatprep.subr.mxu0 0.0
        %1645 = vmatpush1.msra.mxu0 0.0
        %1646 = vmatprep.subr.mxu0 0.0
        %1647 = vmatpush1.msra.mxu0 0.0
        %1648 = vmatprep.subr.mxu0 0.0
        %1649 = vmatpush1.msra.mxu0 0.0
        %1650 = vmatprep.subr.mxu0 0.0
        %1651 = vmatpush1.msra.mxu0 0.0
        %1652 = vmatprep.subr.mxu0 0.0
        %1653 = vmatpush1.msra.mxu0 0.0
        %1654 = vmatprep.subr.mxu0 0.0
        %1655 = vmatpush1.msra.mxu0 0.0
        %1656 = vmatprep.subr.mxu0 0.0
        %1657 = vmatpush1.msra.mxu0 0.0
        %1658 = vmatprep.subr.mxu0 0.0
        %1659 = vmatpush1.msra.mxu0 0.0
        %1660 = vmatprep.subr.mxu0 0.0
        %1661 = vmatpush1.msra.mxu0 0.0
        %1662 = vmatprep.subr.mxu0 0.0
        %1663 = vmatpush1.msra.mxu0 0.0
        %1664 = vmatprep.subr.mxu0 0.0
        %1665 = vmatpush1.msra.mxu0 0.0
        %1666 = vmatprep.subr.mxu0 0.0
        %1667 = vmatpush1.msra.mxu0 0.0
        %1668 = vmatprep.subr.mxu0 0.0
        %1669 = vmatpush1.msra.mxu0 0.0
        %1670 = vmatprep.subr.mxu0 0.0
        %1671 = vmatpush1.msra.mxu0 0.0
        %1672 = vmatprep.subr.mxu0 0.0
        %1673 = vmatpush1.msra.mxu0 0.0
        %1674 = vmatprep.subr.mxu0 0.0
        %1675 = vmatpush1.msra.mxu0 0.0
        %1676 = vmatprep.subr.mxu0 0.0
        %1677 = vmatpush1.msra.mxu0 0.0
        %1678 = vmatprep.subr.mxu0 0.0
        %1679 = vmatpush1.msra.mxu0 0.0
        %1680 = vmatprep.subr.mxu0 0.0
        %1681 = vmatpush1.msra.mxu0 0.0
        %1682 = vmatprep.subr.mxu0 0.0
        %1683 = vmatpush1.msra.mxu0 0.0
        %1684 = vmatprep.mubr.f32.mxu0 0.0
        %1685 = vmatmul.mubr.f32.gmra.mrb[0].mxu0 %v1618
        %v1686 = vpop.f32.mrb[0].mxu0
        %v1687 = vadd.f32 0.0, %v1686
        %v1688 = vpop.f32.mrb[0].mxu0
        %1689 = vdwg.mxu0
        %v1690 = vcombine.low %v1176, %v1322
        %v1691 = vcombine.high %v1176, %v1322
        %v1693 = vunpack.c.l.s4 1983009808
        %v1694 = vunpack.c.0.s8 %v1693
        %v1695 = vlaneseq
        %v1696 = vshrl.u32 %v1695, 7
        %v1697 = vsub.s32 %v1694, %v1696
        %v1698 = vrot.slane %v1690, %v1697
        %v1700 = vunpack.c.l.s4 1983009808
        %v1701 = vunpack.c.0.s8 %v1700
        %v1702 = vlaneseq
        %v1703 = vshrl.u32 %v1702, 7
        %v1704 = vsub.s32 %v1701, %v1703
        %v1705 = vrot.slane %v1691, %v1704
        %v1706 = vcombine.low %v1249, %v1395
        %v1707 = vcombine.high %v1249, %v1395
        %v1709 = vunpack.c.l.s4 1983009808
        %v1710 = vunpack.c.0.s8 %v1709
        %v1711 = vlaneseq
        %v1712 = vshrl.u32 %v1711, 7
        %v1713 = vsub.s32 %v1710, %v1712
        %v1714 = vrot.slane %v1706, %v1713
        %v1716 = vunpack.c.l.s4 1983009808
        %v1717 = vunpack.c.0.s8 %v1716
        %v1718 = vlaneseq
        %v1719 = vshrl.u32 %v1718, 7
        %v1720 = vsub.s32 %v1717, %v1719
        %v1721 = vrot.slane %v1707, %v1720
        %v1722 = vcombine.low %v1468, %v1614
        %v1723 = vcombine.high %v1468, %v1614
        %v1725 = vunpack.c.l.s4 1983009808
        %v1726 = vunpack.c.0.s8 %v1725
        %v1727 = vlaneseq
        %v1728 = vshrl.u32 %v1727, 7
        %v1729 = vsub.s32 %v1726, %v1728
        %v1730 = vrot.slane %v1722, %v1729
        %v1732 = vunpack.c.l.s4 1983009808
        %v1733 = vunpack.c.0.s8 %v1732
        %v1734 = vlaneseq
        %v1735 = vshrl.u32 %v1734, 7
        %v1736 = vsub.s32 %v1733, %v1735
        %v1737 = vrot.slane %v1723, %v1736
        %v1738 = vcombine.low %v1541, %v1687
        %v1739 = vcombine.high %v1541, %v1687
        %v1741 = vunpack.c.l.s4 1983009808
        %v1742 = vunpack.c.0.s8 %v1741
        %v1743 = vlaneseq
        %v1744 = vshrl.u32 %v1743, 7
        %v1745 = vsub.s32 %v1742, %v1744
        %v1746 = vrot.slane %v1738, %v1745
        %v1748 = vunpack.c.l.s4 1983009808
        %v1749 = vunpack.c.0.s8 %v1748
        %v1750 = vlaneseq
        %v1751 = vshrl.u32 %v1750, 7
        %v1752 = vsub.s32 %v1749, %v1751
        %v1753 = vrot.slane %v1739, %v1752
        %v1754 = vcombine.low %v1698, %v1714
        %v1755 = vcombine.high %v1698, %v1714
        %v1757 = vunpack.c.l.s4 1934713408
        %v1758 = vunpack.c.0.s8 %v1757
        %v1759 = vlaneseq
        %v1760 = vshrl.u32 %v1759, 7
        %v1761 = vsub.s32 %v1758, %v1760
        %v1762 = vrot.slane %v1754, %v1761
        %v1764 = vunpack.c.l.s4 1934713408
        %v1765 = vunpack.c.0.s8 %v1764
        %v1766 = vlaneseq
        %v1767 = vshrl.u32 %v1766, 7
        %v1768 = vsub.s32 %v1765, %v1767
        %v1769 = vrot.slane %v1755, %v1768
        %v1770 = vcombine.low %v1705, %v1721
        %v1771 = vcombine.high %v1705, %v1721
        %v1773 = vunpack.c.l.s4 1934713408
        %v1774 = vunpack.c.0.s8 %v1773
        %v1775 = vlaneseq
        %v1776 = vshrl.u32 %v1775, 7
        %v1777 = vsub.s32 %v1774, %v1776
        %v1778 = vrot.slane %v1770, %v1777
        %v1780 = vunpack.c.l.s4 1934713408
        %v1781 = vunpack.c.0.s8 %v1780
        %v1782 = vlaneseq
        %v1783 = vshrl.u32 %v1782, 7
        %v1784 = vsub.s32 %v1781, %v1783
        %v1785 = vrot.slane %v1771, %v1784
        %v1786 = vcombine.low %v1730, %v1746
        %v1787 = vcombine.high %v1730, %v1746
        %v1789 = vunpack.c.l.s4 1934713408
        %v1790 = vunpack.c.0.s8 %v1789
        %v1791 = vlaneseq
        %v1792 = vshrl.u32 %v1791, 7
        %v1793 = vsub.s32 %v1790, %v1792
        %v1794 = vrot.slane %v1786, %v1793
        %v1796 = vunpack.c.l.s4 1934713408
        %v1797 = vunpack.c.0.s8 %v1796
        %v1798 = vlaneseq
        %v1799 = vshrl.u32 %v1798, 7
        %v1800 = vsub.s32 %v1797, %v1799
        %v1801 = vrot.slane %v1787, %v1800
        %v1802 = vcombine.low %v1737, %v1753
        %v1803 = vcombine.high %v1737, %v1753
        %v1805 = vunpack.c.l.s4 1934713408
        %v1806 = vunpack.c.0.s8 %v1805
        %v1807 = vlaneseq
        %v1808 = vshrl.u32 %v1807, 7
        %v1809 = vsub.s32 %v1806, %v1808
        %v1810 = vrot.slane %v1802, %v1809
        %v1812 = vunpack.c.l.s4 1934713408
        %v1813 = vunpack.c.0.s8 %v1812
        %v1814 = vlaneseq
        %v1815 = vshrl.u32 %v1814, 7
        %v1816 = vsub.s32 %v1813, %v1815
        %v1817 = vrot.slane %v1803, %v1816
        %v1818 = vcombine.low %v1762, %v1794
        %v1819 = vcombine.high %v1762, %v1794
        %v1820 = vcombine.low %v1769, %v1801
        %v1821 = vcombine.high %v1769, %v1801
        %v1822 = vcombine.low %v1778, %v1810
        %v1823 = vcombine.high %v1778, %v1810
        %v1824 = vcombine.low %v1785, %v1817
        %v1825 = vcombine.high %v1785, %v1817
        %v1826 = vld [vmem:[%s3] sm:$0xff]
        %v1827 = vld [vmem:[%s3 + $0x8] sm:$0xff]
        %v1828 = vld [vmem:[%s3 + $0x10] sm:$0xff]
        %v1829 = vld [vmem:[%s3 + $0x18] sm:$0xff]
        %v1830 = vld [vmem:[%s3 + $0x20] sm:$0xff]
        %v1831 = vld [vmem:[%s3 + $0x28] sm:$0xff]
        %v1832 = vld [vmem:[%s3 + $0x30] sm:$0xff]
        %v1833 = vld [vmem:[%s3 + $0x38] sm:$0xff]
        %v1834 = vld [vmem:[%s3 + $0x40] sm:$0xff]
        %v1835 = vld [vmem:[%s3 + $0x48] sm:$0xff]
        %v1836 = vld [vmem:[%s3 + $0x50] sm:$0xff]
        %v1837 = vld [vmem:[%s3 + $0x58] sm:$0xff]
        %v1838 = vld [vmem:[%s3 + $0x60] sm:$0xff]
        %v1839 = vld [vmem:[%s3 + $0x68] sm:$0xff]
        %v1840 = vld [vmem:[%s3 + $0x70] sm:$0xff]
        %v1841 = vld [vmem:[%s3 + $0x78] sm:$0xff]
        %v1842 = vld [vmem:[%s3 + $0x80] sm:$0xff]
        %v1843 = vld [vmem:[%s3 + $0x88] sm:$0xff]
        %v1844 = vld [vmem:[%s3 + $0x90] sm:$0xff]
        %v1845 = vld [vmem:[%s3 + $0x98] sm:$0xff]
        %v1846 = vld [vmem:[%s3 + $0xa0] sm:$0xff]
        %v1847 = vld [vmem:[%s3 + $0xa8] sm:$0xff]
        %v1848 = vld [vmem:[%s3 + $0xb0] sm:$0xff]
        %v1849 = vld [vmem:[%s3 + $0xb8] sm:$0xff]
        %v1850 = vld [vmem:[%s3 + $0xc0] sm:$0xff]
        %v1851 = vld [vmem:[%s3 + $0xc8] sm:$0xff]
        %v1852 = vld [vmem:[%s3 + $0xd0] sm:$0xff]
        %v1853 = vld [vmem:[%s3 + $0xd8] sm:$0xff]
        %v1854 = vld [vmem:[%s3 + $0xe0] sm:$0xff]
        %v1855 = vld [vmem:[%s3 + $0xe8] sm:$0xff]
        %v1856 = vld [vmem:[%s3 + $0xf0] sm:$0xff]
        %v1857 = vld [vmem:[%s3 + $0xf8] sm:$0xff]
        %v1858 = vld [vmem:[%s3 + $0x100] sm:$0xff]
        %v1859 = vld [vmem:[%s3 + $0x108] sm:$0xff]
        %v1860 = vld [vmem:[%s3 + $0x110] sm:$0xff]
        %v1861 = vld [vmem:[%s3 + $0x118] sm:$0xff]
        %v1862 = vld [vmem:[%s3 + $0x120] sm:$0xff]
        %v1863 = vld [vmem:[%s3 + $0x128] sm:$0xff]
        %v1864 = vld [vmem:[%s3 + $0x130] sm:$0xff]
        %v1865 = vld [vmem:[%s3 + $0x138] sm:$0xff]
        %v1866 = vld [vmem:[%s3 + $0x140] sm:$0xff]
        %v1867 = vld [vmem:[%s3 + $0x148] sm:$0xff]
        %v1868 = vld [vmem:[%s3 + $0x150] sm:$0xff]
        %v1869 = vld [vmem:[%s3 + $0x158] sm:$0xff]
        %v1870 = vld [vmem:[%s3 + $0x160] sm:$0xff]
        %v1871 = vld [vmem:[%s3 + $0x168] sm:$0xff]
        %v1872 = vld [vmem:[%s3 + $0x170] sm:$0xff]
        %v1873 = vld [vmem:[%s3 + $0x178] sm:$0xff]
        %v1874 = vld [vmem:[%s3 + $0x180] sm:$0xff]
        %v1875 = vld [vmem:[%s3 + $0x188] sm:$0xff]
        %v1876 = vld [vmem:[%s3 + $0x190] sm:$0xff]
        %v1877 = vld [vmem:[%s3 + $0x198] sm:$0xff]
        %v1878 = vld [vmem:[%s3 + $0x1a0] sm:$0xff]
        %v1879 = vld [vmem:[%s3 + $0x1a8] sm:$0xff]
        %v1880 = vld [vmem:[%s3 + $0x1b0] sm:$0xff]
        %v1881 = vld [vmem:[%s3 + $0x1b8] sm:$0xff]
        %v1882 = vld [vmem:[%s3 + $0x1c0] sm:$0xff]
        %v1883 = vld [vmem:[%s3 + $0x1c8] sm:$0xff]
        %v1884 = vld [vmem:[%s3 + $0x1d0] sm:$0xff]
        %v1885 = vld [vmem:[%s3 + $0x1d8] sm:$0xff]
        %v1886 = vld [vmem:[%s3 + $0x1e0] sm:$0xff]
        %v1887 = vld [vmem:[%s3 + $0x1e8] sm:$0xff]
        %v1888 = vld [vmem:[%s3 + $0x1f0] sm:$0xff]
        %v1889 = vld [vmem:[%s3 + $0x1f8] sm:$0xff]
        %v1890 = vld [vmem:[%s3 + $0x200] sm:$0xff]
        %v1891 = vld [vmem:[%s3 + $0x208] sm:$0xff]
        %v1892 = vld [vmem:[%s3 + $0x210] sm:$0xff]
        %v1893 = vld [vmem:[%s3 + $0x218] sm:$0xff]
        %v1894 = vld [vmem:[%s3 + $0x220] sm:$0xff]
        %v1895 = vld [vmem:[%s3 + $0x228] sm:$0xff]
        %v1896 = vld [vmem:[%s3 + $0x230] sm:$0xff]
        %v1897 = vld [vmem:[%s3 + $0x238] sm:$0xff]
        %v1898 = vld [vmem:[%s3 + $0x240] sm:$0xff]
        %v1899 = vld [vmem:[%s3 + $0x248] sm:$0xff]
        %v1900 = vld [vmem:[%s3 + $0x250] sm:$0xff]
        %v1901 = vld [vmem:[%s3 + $0x258] sm:$0xff]
        %v1902 = vld [vmem:[%s3 + $0x260] sm:$0xff]
        %v1903 = vld [vmem:[%s3 + $0x268] sm:$0xff]
        %v1904 = vld [vmem:[%s3 + $0x270] sm:$0xff]
        %v1905 = vld [vmem:[%s3 + $0x278] sm:$0xff]
        %v1906 = vld [vmem:[%s3 + $0x280] sm:$0xff]
        %v1907 = vld [vmem:[%s3 + $0x288] sm:$0xff]
        %v1908 = vld [vmem:[%s3 + $0x290] sm:$0xff]
        %v1909 = vld [vmem:[%s3 + $0x298] sm:$0xff]
        %v1910 = vld [vmem:[%s3 + $0x2a0] sm:$0xff]
        %v1911 = vld [vmem:[%s3 + $0x2a8] sm:$0xff]
        %v1912 = vld [vmem:[%s3 + $0x2b0] sm:$0xff]
        %v1913 = vld [vmem:[%s3 + $0x2b8] sm:$0xff]
        %v1914 = vld [vmem:[%s3 + $0x2c0] sm:$0xff]
        %v1915 = vld [vmem:[%s3 + $0x2c8] sm:$0xff]
        %v1916 = vld [vmem:[%s3 + $0x2d0] sm:$0xff]
        %v1917 = vld [vmem:[%s3 + $0x2d8] sm:$0xff]
        %v1918 = vld [vmem:[%s3 + $0x2e0] sm:$0xff]
        %v1919 = vld [vmem:[%s3 + $0x2e8] sm:$0xff]
        %v1920 = vld [vmem:[%s3 + $0x2f0] sm:$0xff]
        %v1921 = vld [vmem:[%s3 + $0x2f8] sm:$0xff]
        %v1922 = vld [vmem:[%s3 + $0x300] sm:$0xff]
        %v1923 = vld [vmem:[%s3 + $0x308] sm:$0xff]
        %v1924 = vld [vmem:[%s3 + $0x310] sm:$0xff]
        %v1925 = vld [vmem:[%s3 + $0x318] sm:$0xff]
        %v1926 = vld [vmem:[%s3 + $0x320] sm:$0xff]
        %v1927 = vld [vmem:[%s3 + $0x328] sm:$0xff]
        %v1928 = vld [vmem:[%s3 + $0x330] sm:$0xff]
        %v1929 = vld [vmem:[%s3 + $0x338] sm:$0xff]
        %v1930 = vld [vmem:[%s3 + $0x340] sm:$0xff]
        %v1931 = vld [vmem:[%s3 + $0x348] sm:$0xff]
        %v1932 = vld [vmem:[%s3 + $0x350] sm:$0xff]
        %v1933 = vld [vmem:[%s3 + $0x358] sm:$0xff]
        %v1934 = vld [vmem:[%s3 + $0x360] sm:$0xff]
        %v1935 = vld [vmem:[%s3 + $0x368] sm:$0xff]
        %v1936 = vld [vmem:[%s3 + $0x370] sm:$0xff]
        %v1937 = vld [vmem:[%s3 + $0x378] sm:$0xff]
        %v1938 = vld [vmem:[%s3 + $0x380] sm:$0xff]
        %v1939 = vld [vmem:[%s3 + $0x388] sm:$0xff]
        %v1940 = vld [vmem:[%s3 + $0x390] sm:$0xff]
        %v1941 = vld [vmem:[%s3 + $0x398] sm:$0xff]
        %v1942 = vld [vmem:[%s3 + $0x3a0] sm:$0xff]
        %v1943 = vld [vmem:[%s3 + $0x3a8] sm:$0xff]
        %v1944 = vld [vmem:[%s3 + $0x3b0] sm:$0xff]
        %v1945 = vld [vmem:[%s3 + $0x3b8] sm:$0xff]
        %v1946 = vld [vmem:[%s3 + $0x3c0] sm:$0xff]
        %v1947 = vld [vmem:[%s3 + $0x3c8] sm:$0xff]
        %v1948 = vld [vmem:[%s3 + $0x3d0] sm:$0xff]
        %v1949 = vld [vmem:[%s3 + $0x3d8] sm:$0xff]
        %v1950 = vld [vmem:[%s3 + $0x3e0] sm:$0xff]
        %v1951 = vld [vmem:[%s3 + $0x3e8] sm:$0xff]
        %v1952 = vld [vmem:[%s3 + $0x3f0] sm:$0xff]
        %v1953 = vld [vmem:[%s3 + $0x3f8] sm:$0xff]
        %s1954 = sld [smem:[#allocation2]]
        %v1955 = vstv %s1954
        %1956 = vmatprep.subr.mxu0 0.0
        %1957 = vmatpush1.msra.mxu0 %v1826
        %1958 = vmatprep.subr.mxu0 0.0
        %1959 = vmatpush1.msra.mxu0 %v1827
        %1960 = vmatprep.subr.mxu0 0.0
        %1961 = vmatpush1.msra.mxu0 %v1828
        %1962 = vmatprep.subr.mxu0 0.0
        %1963 = vmatpush1.msra.mxu0 %v1829
        %1964 = vmatprep.subr.mxu0 0.0
        %1965 = vmatpush1.msra.mxu0 %v1830
        %1966 = vmatprep.subr.mxu0 0.0
        %1967 = vmatpush1.msra.mxu0 %v1831
        %1968 = vmatprep.subr.mxu0 0.0
        %1969 = vmatpush1.msra.mxu0 %v1832
        %1970 = vmatprep.subr.mxu0 0.0
        %1971 = vmatpush1.msra.mxu0 %v1833
        %1972 = vmatprep.subr.mxu0 0.0
        %1973 = vmatpush1.msra.mxu0 %v1834
        %1974 = vmatprep.subr.mxu0 0.0
        %1975 = vmatpush1.msra.mxu0 %v1835
        %1976 = vmatprep.subr.mxu0 0.0
        %1977 = vmatpush1.msra.mxu0 %v1836
        %1978 = vmatprep.subr.mxu0 0.0
        %1979 = vmatpush1.msra.mxu0 %v1837
        %1980 = vmatprep.subr.mxu0 0.0
        %1981 = vmatpush1.msra.mxu0 %v1838
        %1982 = vmatprep.subr.mxu0 0.0
        %1983 = vmatpush1.msra.mxu0 %v1839
        %1984 = vmatprep.subr.mxu0 0.0
        %1985 = vmatpush1.msra.mxu0 %v1840
        %1986 = vmatprep.subr.mxu0 0.0
        %1987 = vmatpush1.msra.mxu0 %v1841
        %1988 = vmatprep.subr.mxu0 0.0
        %1989 = vmatpush1.msra.mxu0 %v1842
        %1990 = vmatprep.subr.mxu0 0.0
        %1991 = vmatpush1.msra.mxu0 %v1843
        %1992 = vmatprep.subr.mxu0 0.0
        %1993 = vmatpush1.msra.mxu0 %v1844
        %1994 = vmatprep.subr.mxu0 0.0
        %1995 = vmatpush1.msra.mxu0 %v1845
        %1996 = vmatprep.subr.mxu0 0.0
        %1997 = vmatpush1.msra.mxu0 %v1846
        %1998 = vmatprep.subr.mxu0 0.0
        %1999 = vmatpush1.msra.mxu0 %v1847
        %2000 = vmatprep.subr.mxu0 0.0
        %2001 = vmatpush1.msra.mxu0 %v1848
        %2002 = vmatprep.subr.mxu0 0.0
        %2003 = vmatpush1.msra.mxu0 %v1849
        %2004 = vmatprep.subr.mxu0 0.0
        %2005 = vmatpush1.msra.mxu0 %v1850
        %2006 = vmatprep.subr.mxu0 0.0
        %2007 = vmatpush1.msra.mxu0 %v1851
        %2008 = vmatprep.subr.mxu0 0.0
        %2009 = vmatpush1.msra.mxu0 %v1852
        %2010 = vmatprep.subr.mxu0 0.0
        %2011 = vmatpush1.msra.mxu0 %v1853
        %2012 = vmatprep.subr.mxu0 0.0
        %2013 = vmatpush1.msra.mxu0 %v1854
        %2014 = vmatprep.subr.mxu0 0.0
        %2015 = vmatpush1.msra.mxu0 %v1855
        %2016 = vmatprep.subr.mxu0 0.0
        %2017 = vmatpush1.msra.mxu0 %v1856
        %2018 = vmatprep.subr.mxu0 0.0
        %2019 = vmatpush1.msra.mxu0 %v1857
        %2020 = vmatprep.mubr.f32.mxu0 %v1819
        %2021 = vmatmul.mubr.f32.gmra.mrb[0].mxu0 %v1818
        %v2022 = vpop.f32.mrb[0].mxu0
        %v2023 = vadd.f32 %v1955, %v2022
        %v2024 = vpop.f32.mrb[0].mxu0
        %2025 = vdwg.mxu0
        %2026 = vmatprep.subr.mxu0 0.0
        %2027 = vmatpush1.msra.mxu0 %v1858
        %2028 = vmatprep.subr.mxu0 0.0
        %2029 = vmatpush1.msra.mxu0 %v1859
        %2030 = vmatprep.subr.mxu0 0.0
        %2031 = vmatpush1.msra.mxu0 %v1860
        %2032 = vmatprep.subr.mxu0 0.0
        %2033 = vmatpush1.msra.mxu0 %v1861
        %2034 = vmatprep.subr.mxu0 0.0
        %2035 = vmatpush1.msra.mxu0 %v1862
        %2036 = vmatprep.subr.mxu0 0.0
        %2037 = vmatpush1.msra.mxu0 %v1863
        %2038 = vmatprep.subr.mxu0 0.0
        %2039 = vmatpush1.msra.mxu0 %v1864
        %2040 = vmatprep.subr.mxu0 0.0
        %2041 = vmatpush1.msra.mxu0 %v1865
        %2042 = vmatprep.subr.mxu0 0.0
        %2043 = vmatpush1.msra.mxu0 %v1866
        %2044 = vmatprep.subr.mxu0 0.0
        %2045 = vmatpush1.msra.mxu0 %v1867
        %2046 = vmatprep.subr.mxu0 0.0
        %2047 = vmatpush1.msra.mxu0 %v1868
        %2048 = vmatprep.subr.mxu0 0.0
        %2049 = vmatpush1.msra.mxu0 %v1869
        %2050 = vmatprep.subr.mxu0 0.0
        %2051 = vmatpush1.msra.mxu0 %v1870
        %2052 = vmatprep.subr.mxu0 0.0
        %2053 = vmatpush1.msra.mxu0 %v1871
        %2054 = vmatprep.subr.mxu0 0.0
        %2055 = vmatpush1.msra.mxu0 %v1872
        %2056 = vmatprep.subr.mxu0 0.0
        %2057 = vmatpush1.msra.mxu0 %v1873
        %2058 = vmatprep.subr.mxu0 0.0
        %2059 = vmatpush1.msra.mxu0 %v1874
        %2060 = vmatprep.subr.mxu0 0.0
        %2061 = vmatpush1.msra.mxu0 %v1875
        %2062 = vmatprep.subr.mxu0 0.0
        %2063 = vmatpush1.msra.mxu0 %v1876
        %2064 = vmatprep.subr.mxu0 0.0
        %2065 = vmatpush1.msra.mxu0 %v1877
        %2066 = vmatprep.subr.mxu0 0.0
        %2067 = vmatpush1.msra.mxu0 %v1878
        %2068 = vmatprep.subr.mxu0 0.0
        %2069 = vmatpush1.msra.mxu0 %v1879
        %2070 = vmatprep.subr.mxu0 0.0
        %2071 = vmatpush1.msra.mxu0 %v1880
        %2072 = vmatprep.subr.mxu0 0.0
        %2073 = vmatpush1.msra.mxu0 %v1881
        %2074 = vmatprep.subr.mxu0 0.0
        %2075 = vmatpush1.msra.mxu0 %v1882
        %2076 = vmatprep.subr.mxu0 0.0
        %2077 = vmatpush1.msra.mxu0 %v1883
        %2078 = vmatprep.subr.mxu0 0.0
        %2079 = vmatpush1.msra.mxu0 %v1884
        %2080 = vmatprep.subr.mxu0 0.0
        %2081 = vmatpush1.msra.mxu0 %v1885
        %2082 = vmatprep.subr.mxu0 0.0
        %2083 = vmatpush1.msra.mxu0 %v1886
        %2084 = vmatprep.subr.mxu0 0.0
        %2085 = vmatpush1.msra.mxu0 %v1887
        %2086 = vmatprep.subr.mxu0 0.0
        %2087 = vmatpush1.msra.mxu0 %v1888
        %2088 = vmatprep.subr.mxu0 0.0
        %2089 = vmatpush1.msra.mxu0 %v1889
        %2090 = vmatprep.mubr.f32.mxu0 %v1821
        %2091 = vmatmul.mubr.f32.gmra.mrb[0].mxu0 %v1820
        %v2092 = vpop.f32.mrb[0].mxu0
        %v2093 = vadd.f32 %v2023, %v2092
        %v2094 = vpop.f32.mrb[0].mxu0
        %2095 = vdwg.mxu0
        %2096 = vmatprep.subr.mxu0 0.0
        %2097 = vmatpush1.msra.mxu0 %v1890
        %2098 = vmatprep.subr.mxu0 0.0
        %2099 = vmatpush1.msra.mxu0 %v1891
        %2100 = vmatprep.subr.mxu0 0.0
        %2101 = vmatpush1.msra.mxu0 %v1892
        %2102 = vmatprep.subr.mxu0 0.0
        %2103 = vmatpush1.msra.mxu0 %v1893
        %2104 = vmatprep.subr.mxu0 0.0
        %2105 = vmatpush1.msra.mxu0 %v1894
        %2106 = vmatprep.subr.mxu0 0.0
        %2107 = vmatpush1.msra.mxu0 %v1895
        %2108 = vmatprep.subr.mxu0 0.0
        %2109 = vmatpush1.msra.mxu0 %v1896
        %2110 = vmatprep.subr.mxu0 0.0
        %2111 = vmatpush1.msra.mxu0 %v1897
        %2112 = vmatprep.subr.mxu0 0.0
        %2113 = vmatpush1.msra.mxu0 %v1898
        %2114 = vmatprep.subr.mxu0 0.0
        %2115 = vmatpush1.msra.mxu0 %v1899
        %2116 = vmatprep.subr.mxu0 0.0
        %2117 = vmatpush1.msra.mxu0 %v1900
        %2118 = vmatprep.subr.mxu0 0.0
        %2119 = vmatpush1.msra.mxu0 %v1901
        %2120 = vmatprep.subr.mxu0 0.0
        %2121 = vmatpush1.msra.mxu0 %v1902
        %2122 = vmatprep.subr.mxu0 0.0
        %2123 = vmatpush1.msra.mxu0 %v1903
        %2124 = vmatprep.subr.mxu0 0.0
        %2125 = vmatpush1.msra.mxu0 %v1904
        %2126 = vmatprep.subr.mxu0 0.0
        %2127 = vmatpush1.msra.mxu0 %v1905
        %2128 = vmatprep.subr.mxu0 0.0
        %2129 = vmatpush1.msra.mxu0 %v1906
        %2130 = vmatprep.subr.mxu0 0.0
        %2131 = vmatpush1.msra.mxu0 %v1907
        %2132 = vmatprep.subr.mxu0 0.0
        %2133 = vmatpush1.msra.mxu0 %v1908
        %2134 = vmatprep.subr.mxu0 0.0
        %2135 = vmatpush1.msra.mxu0 %v1909
        %2136 = vmatprep.subr.mxu0 0.0
        %2137 = vmatpush1.msra.mxu0 %v1910
        %2138 = vmatprep.subr.mxu0 0.0
        %2139 = vmatpush1.msra.mxu0 %v1911
        %2140 = vmatprep.subr.mxu0 0.0
        %2141 = vmatpush1.msra.mxu0 %v1912
        %2142 = vmatprep.subr.mxu0 0.0
        %2143 = vmatpush1.msra.mxu0 %v1913
        %2144 = vmatprep.subr.mxu0 0.0
        %2145 = vmatpush1.msra.mxu0 %v1914
        %2146 = vmatprep.subr.mxu0 0.0
        %2147 = vmatpush1.msra.mxu0 %v1915
        %2148 = vmatprep.subr.mxu0 0.0
        %2149 = vmatpush1.msra.mxu0 %v1916
        %2150 = vmatprep.subr.mxu0 0.0
        %2151 = vmatpush1.msra.mxu0 %v1917
        %2152 = vmatprep.subr.mxu0 0.0
        %2153 = vmatpush1.msra.mxu0 %v1918
        %2154 = vmatprep.subr.mxu0 0.0
        %2155 = vmatpush1.msra.mxu0 %v1919
        %2156 = vmatprep.subr.mxu0 0.0
        %2157 = vmatpush1.msra.mxu0 %v1920
        %2158 = vmatprep.subr.mxu0 0.0
        %2159 = vmatpush1.msra.mxu0 %v1921
        %2160 = vmatprep.mubr.f32.mxu0 %v1823
        %2161 = vmatmul.mubr.f32.gmra.mrb[0].mxu0 %v1822
        %v2162 = vpop.f32.mrb[0].mxu0
        %v2163 = vadd.f32 %v2093, %v2162
        %v2164 = vpop.f32.mrb[0].mxu0
        %2165 = vdwg.mxu0
        %2166 = vmatprep.subr.mxu0 0.0
        %2167 = vmatpush1.msra.mxu0 %v1922
        %2168 = vmatprep.subr.mxu0 0.0
        %2169 = vmatpush1.msra.mxu0 %v1923
        %2170 = vmatprep.subr.mxu0 0.0
        %2171 = vmatpush1.msra.mxu0 %v1924
        %2172 = vmatprep.subr.mxu0 0.0
        %2173 = vmatpush1.msra.mxu0 %v1925
        %2174 = vmatprep.subr.mxu0 0.0
        %2175 = vmatpush1.msra.mxu0 %v1926
        %2176 = vmatprep.subr.mxu0 0.0
        %2177 = vmatpush1.msra.mxu0 %v1927
        %2178 = vmatprep.subr.mxu0 0.0
        %2179 = vmatpush1.msra.mxu0 %v1928
        %2180 = vmatprep.subr.mxu0 0.0
        %2181 = vmatpush1.msra.mxu0 %v1929
        %2182 = vmatprep.subr.mxu0 0.0
        %2183 = vmatpush1.msra.mxu0 %v1930
        %2184 = vmatprep.subr.mxu0 0.0
        %2185 = vmatpush1.msra.mxu0 %v1931
        %2186 = vmatprep.subr.mxu0 0.0
        %2187 = vmatpush1.msra.mxu0 %v1932
        %2188 = vmatprep.subr.mxu0 0.0
        %2189 = vmatpush1.msra.mxu0 %v1933
        %2190 = vmatprep.subr.mxu0 0.0
        %2191 = vmatpush1.msra.mxu0 %v1934
        %2192 = vmatprep.subr.mxu0 0.0
        %2193 = vmatpush1.msra.mxu0 %v1935
        %2194 = vmatprep.subr.mxu0 0.0
        %2195 = vmatpush1.msra.mxu0 %v1936
        %2196 = vmatprep.subr.mxu0 0.0
        %2197 = vmatpush1.msra.mxu0 %v1937
        %2198 = vmatprep.subr.mxu0 0.0
        %2199 = vmatpush1.msra.mxu0 %v1938
        %2200 = vmatprep.subr.mxu0 0.0
        %2201 = vmatpush1.msra.mxu0 %v1939
        %2202 = vmatprep.subr.mxu0 0.0
        %2203 = vmatpush1.msra.mxu0 %v1940
        %2204 = vmatprep.subr.mxu0 0.0
        %2205 = vmatpush1.msra.mxu0 %v1941
        %2206 = vmatprep.subr.mxu0 0.0
        %2207 = vmatpush1.msra.mxu0 %v1942
        %2208 = vmatprep.subr.mxu0 0.0
        %2209 = vmatpush1.msra.mxu0 %v1943
        %2210 = vmatprep.subr.mxu0 0.0
        %2211 = vmatpush1.msra.mxu0 %v1944
        %2212 = vmatprep.subr.mxu0 0.0
        %2213 = vmatpush1.msra.mxu0 %v1945
        %2214 = vmatprep.subr.mxu0 0.0
        %2215 = vmatpush1.msra.mxu0 %v1946
        %2216 = vmatprep.subr.mxu0 0.0
        %2217 = vmatpush1.msra.mxu0 %v1947
        %2218 = vmatprep.subr.mxu0 0.0
        %2219 = vmatpush1.msra.mxu0 %v1948
        %2220 = vmatprep.subr.mxu0 0.0
        %2221 = vmatpush1.msra.mxu0 %v1949
        %2222 = vmatprep.subr.mxu0 0.0
        %2223 = vmatpush1.msra.mxu0 %v1950
        %2224 = vmatprep.subr.mxu0 0.0
        %2225 = vmatpush1.msra.mxu0 %v1951
        %2226 = vmatprep.subr.mxu0 0.0
        %2227 = vmatpush1.msra.mxu0 %v1952
        %2228 = vmatprep.subr.mxu0 0.0
        %2229 = vmatpush1.msra.mxu0 %v1953
        %2230 = vmatprep.mubr.f32.mxu0 %v1825
        %2231 = vmatmul.mubr.f32.gmra.mrb[0].mxu0 %v1824
        %v2232 = vpop.f32.mrb[0].mxu0
        %v2233 = vadd.f32 %v2163, %v2232
        %v2234 = vpop.f32.mrb[0].mxu0
        %2235 = vdwg.mxu0
        %v2236 = vsub.f32 0.0, %v2233
        %v2237 = vmul.f32 %v2236, 1.442695
        %v2238 = vpow.pop %v2237
        %v2239 = vadd.f32 %v2238, 1.0
        %v2240 = vrcp.pop %v2239
        %v2241 = vmul.f32 1.0, %v2240
        %vm2242 = vcmask 7168
        %2243 = vst.msk [vmem:[%s258] sm:$0xff] %vm2242, %v2241
        %v2244 = vcombine.low %v1091, %v1095
        %v2245 = vcombine.high %v1091, %v1095
        %v2247 = vunpack.c.l.s4 1983009808
        %v2248 = vunpack.c.0.s8 %v2247
        %v2249 = vlaneseq
        %v2250 = vshrl.u32 %v2249, 7
        %v2251 = vsub.s32 %v2248, %v2250
        %v2252 = vrot.slane %v2244, %v2251
        %v2254 = vunpack.c.l.s4 1983009808
        %v2255 = vunpack.c.0.s8 %v2254
        %v2256 = vlaneseq
        %v2257 = vshrl.u32 %v2256, 7
        %v2258 = vsub.s32 %v2255, %v2257
        %v2259 = vrot.slane %v2245, %v2258
        %v2260 = vcombine.low %v1093, %v1097
        %v2261 = vcombine.high %v1093, %v1097
        %v2263 = vunpack.c.l.s4 1983009808
        %v2264 = vunpack.c.0.s8 %v2263
        %v2265 = vlaneseq
        %v2266 = vshrl.u32 %v2265, 7
        %v2267 = vsub.s32 %v2264, %v2266
        %v2268 = vrot.slane %v2260, %v2267
        %v2270 = vunpack.c.l.s4 1983009808
        %v2271 = vunpack.c.0.s8 %v2270
        %v2272 = vlaneseq
        %v2273 = vshrl.u32 %v2272, 7
        %v2274 = vsub.s32 %v2271, %v2273
        %v2275 = vrot.slane %v2261, %v2274
        %v2276 = vcombine.low %v1099, %v1103
        %v2277 = vcombine.high %v1099, %v1103
        %v2279 = vunpack.c.l.s4 1983009808
        %v2280 = vunpack.c.0.s8 %v2279
        %v2281 = vlaneseq
        %v2282 = vshrl.u32 %v2281, 7
        %v2283 = vsub.s32 %v2280, %v2282
        %v2284 = vrot.slane %v2276, %v2283
        %v2286 = vunpack.c.l.s4 1983009808
        %v2287 = vunpack.c.0.s8 %v2286
        %v2288 = vlaneseq
        %v2289 = vshrl.u32 %v2288, 7
        %v2290 = vsub.s32 %v2287, %v2289
        %v2291 = vrot.slane %v2277, %v2290
        %v2292 = vcombine.low %v1101, %v1105
        %v2293 = vcombine.high %v1101, %v1105
        %v2295 = vunpack.c.l.s4 1983009808
        %v2296 = vunpack.c.0.s8 %v2295
        %v2297 = vlaneseq
        %v2298 = vshrl.u32 %v2297, 7
        %v2299 = vsub.s32 %v2296, %v2298
        %v2300 = vrot.slane %v2292, %v2299
        %v2302 = vunpack.c.l.s4 1983009808
        %v2303 = vunpack.c.0.s8 %v2302
        %v2304 = vlaneseq
        %v2305 = vshrl.u32 %v2304, 7
        %v2306 = vsub.s32 %v2303, %v2305
        %v2307 = vrot.slane %v2293, %v2306
        %v2308 = vcombine.low %v2252, %v2268
        %v2309 = vcombine.high %v2252, %v2268
        %v2311 = vunpack.c.l.s4 1934713408
        %v2312 = vunpack.c.0.s8 %v2311
        %v2313 = vlaneseq
        %v2314 = vshrl.u32 %v2313, 7
        %v2315 = vsub.s32 %v2312, %v2314
        %v2316 = vrot.slane %v2308, %v2315
        %v2318 = vunpack.c.l.s4 1934713408
        %v2319 = vunpack.c.0.s8 %v2318
        %v2320 = vlaneseq
        %v2321 = vshrl.u32 %v2320, 7
        %v2322 = vsub.s32 %v2319, %v2321
        %v2323 = vrot.slane %v2309, %v2322
        %v2324 = vcombine.low %v2259, %v2275
        %v2325 = vcombine.high %v2259, %v2275
        %v2327 = vunpack.c.l.s4 1934713408
        %v2328 = vunpack.c.0.s8 %v2327
        %v2329 = vlaneseq
        %v2330 = vshrl.u32 %v2329, 7
        %v2331 = vsub.s32 %v2328, %v2330
        %v2332 = vrot.slane %v2324, %v2331
        %v2334 = vunpack.c.l.s4 1934713408
        %v2335 = vunpack.c.0.s8 %v2334
        %v2336 = vlaneseq
        %v2337 = vshrl.u32 %v2336, 7
        %v2338 = vsub.s32 %v2335, %v2337
        %v2339 = vrot.slane %v2325, %v2338
        %v2340 = vcombine.low %v2284, %v2300
        %v2341 = vcombine.high %v2284, %v2300
        %v2343 = vunpack.c.l.s4 1934713408
        %v2344 = vunpack.c.0.s8 %v2343
        %v2345 = vlaneseq
        %v2346 = vshrl.u32 %v2345, 7
        %v2347 = vsub.s32 %v2344, %v2346
        %v2348 = vrot.slane %v2340, %v2347
        %v2350 = vunpack.c.l.s4 1934713408
        %v2351 = vunpack.c.0.s8 %v2350
        %v2352 = vlaneseq
        %v2353 = vshrl.u32 %v2352, 7
        %v2354 = vsub.s32 %v2351, %v2353
        %v2355 = vrot.slane %v2341, %v2354
        %v2356 = vcombine.low %v2291, %v2307
        %v2357 = vcombine.high %v2291, %v2307
        %v2359 = vunpack.c.l.s4 1934713408
        %v2360 = vunpack.c.0.s8 %v2359
        %v2361 = vlaneseq
        %v2362 = vshrl.u32 %v2361, 7
        %v2363 = vsub.s32 %v2360, %v2362
        %v2364 = vrot.slane %v2356, %v2363
        %v2366 = vunpack.c.l.s4 1934713408
        %v2367 = vunpack.c.0.s8 %v2366
        %v2368 = vlaneseq
        %v2369 = vshrl.u32 %v2368, 7
        %v2370 = vsub.s32 %v2367, %v2369
        %v2371 = vrot.slane %v2357, %v2370
        %v2372 = vcombine.low %v2316, %v2348
        %v2373 = vcombine.high %v2316, %v2348
        %v2374 = vcombine.low %v2323, %v2355
        %v2375 = vcombine.high %v2323, %v2355
        %v2376 = vcombine.low %v2332, %v2364
        %v2377 = vcombine.high %v2332, %v2364
        %v2378 = vcombine.low %v2339, %v2371
        %v2379 = vcombine.high %v2339, %v2371
        %2381 = vrot.lane.b32.xlu0 %v2373, 16
        %v2382 = vpop.permute.xlu0 %2381
        %2385 = vrot.lane.b32.xlu0 %v2374, 32
        %v2386 = vpop.permute.xlu0 %2385
        %2389 = vrot.lane.b32.xlu0 %v2375, 48
        %v2390 = vpop.permute.xlu0 %2389
        %2393 = vrot.lane.b32.xlu0 %v2376, 64
        %v2394 = vpop.permute.xlu0 %2393
        %2397 = vrot.lane.b32.xlu0 %v2377, 80
        %v2398 = vpop.permute.xlu0 %2397
        %2401 = vrot.lane.b32.xlu0 %v2378, 96
        %v2402 = vpop.permute.xlu0 %2401
        %2405 = vrot.lane.b32.xlu0 %v2379, 112
        %v2406 = vpop.permute.xlu0 %2405
        %v2408 = vsel %vm1017, %v2372, %v2382
        %vm2409 = vcmask 261120
        %v2410 = vsel %vm2409, %v2408, %v2386
        %vm2411 = vcmask 392192
        %v2412 = vsel %vm2411, %v2410, %v2390
        %v2413 = vsel %vm406, %v2412, %v2394
        %vm2414 = vcmask 654336
        %v2415 = vsel %vm2414, %v2413, %v2398
        %vm2416 = vcmask 785408
        %v2417 = vsel %vm2416, %v2415, %v2402
        %vm2418 = vcmask 916480
        %v2419 = vsel %vm2418, %v2417, %v2406
        %2420 = vst [vmem:[%s250] sm:$0xff] %v2419
        %p2421 = scmp.lt.s32.totalorder %s22, 1
        %s2422 = scalar_select %p2421, %s22, 1
        %s2423 = smul.addr %s2422, 8
        %s2424 = scalar_lea.vmem %s5, %s2423
        %s2425 = sand.u32 %s166, 1
        %s2426 = scalar_lea.sflag [#allocation4], %s2425
        %s2427 = sand.u32 %s166, 1
        %s2428 = smul.addr %s2427, 8
        %s2429 = scalar_lea.vmem [#allocation3], %s2428
        // Predicated region
        $region41: #{tpu_custom_call.1} parent=39 // pred_check
          %p2430 = pneg %p150
        $region42: #{tpu_custom_call.1} parent=39 // pred_check_branch
          %2432 = sbr.rel (%p2430) target = $region44
        $region43: #{tpu_custom_call.1} parent=39 // pred_region
          _
        $region44: #{tpu_custom_call.1} parent=39 // pred_fallthru
          _
        // Predicated region
        $region45: #{tpu_custom_call.1} parent=39 // pred_check
          %p2433 = pneg %p176
        $region46: #{tpu_custom_call.1} parent=39 // pred_check_branch
          %2435 = sbr.rel (%p2433) target = $region48
        $region47: #{tpu_custom_call.1} parent=39 // pred_region
          %s2437 = ssub.s32 128, 128
          %2438 = vsyncadd %s2426, %s2437
          %s2439 = smul.addr %s22, 128
          %s2440 = scalar_lea.hbm %s6, %s2439
          %s2442 = sshll.u32 %s2429, 4
          %s2443 = int_to_ptr.vmem [resolvable:$true] %s2442
          %2445 = dma.vmem_to_hbm [thread:$0]  %s2443, 128, %s2440, %s2426
        $region48: #{tpu_custom_call.1} parent=39 // pred_fallthru
          _
      $region40: #{tpu_custom_call.1} parent=5 // pred_fallthru
        _
      %p2446 = scmp.le.s32.totalorder 2, %s17
      // Predicated region
      $region49: #{tpu_custom_call.1} parent=5 // pred_check
        %p2447 = pneg %p2446
      $region50: #{tpu_custom_call.1} parent=5 // pred_check_branch
        %2449 = sbr.rel (%p2447) target = $region52
      $region51: #{tpu_custom_call.1} parent=5 // pred_region
        %s2450 = ssub.s32 %s17, 2
        // Predicated region
        $region53: #{tpu_custom_call.1} parent=51 // pred_check
          %p2451 = pneg %p156
        $region54: #{tpu_custom_call.1} parent=51 // pred_check_branch
          %2453 = sbr.rel (%p2451) target = $region56
        $region55: #{tpu_custom_call.1} parent=51 // pred_region
          %p2454 = scmp.lt.s32.totalorder %s23, 1
          %s2455 = scalar_select %p2454, %s23, 1
          %s2456 = smul.addr %s2455, 8
          %s2457 = scalar_lea.vmem %s5, %s2456
        $region56: #{tpu_custom_call.1} parent=51 // pred_fallthru
          _
        // Predicated region
        $region57: #{tpu_custom_call.1} parent=51 // pred_check
          %p2458 = pneg %p182
        $region58: #{tpu_custom_call.1} parent=51 // pred_check_branch
          %2460 = sbr.rel (%p2458) target = $region60
        $region59: #{tpu_custom_call.1} parent=51 // pred_region
          %s2461 = sand.u32 %s167, 1
          %s2462 = scalar_lea.sflag [#allocation4], %s2461
          %s2463 = sand.u32 %s167, 1
          %s2464 = smul.addr %s2463, 8
          %s2465 = scalar_lea.vmem [#allocation3], %s2464
          %2466 = dma.done %s2462, 128
        $region60: #{tpu_custom_call.1} parent=51 // pred_fallthru
          _
      $region52: #{tpu_custom_call.1} parent=5 // pred_fallthru
        _
    $region6: #{tpu_custom_call.1} parent=1 // loop_footer
      %s21 = sadd.s32 1, %s17
    $region7: #{tpu_custom_call.1} parent=1 // loop_footer_branch
      %16 = sbr.rel target = $region3
    $region8: #{tpu_custom_call.1} parent=1 // loop_exit
      _
    %2467 = vsyncpa [#allocation4], 1
    %s2468 = scalar_lea.sflag [#allocation4], 1
    %2469 = vsyncpa %s2468, 1

</llo_original>
